<compile_context>
chip_gen: v5e
topology: v5e:2x2
jax: 0.10.0
libtpu: 0.0.40
codegen_flags: <defaults>
</compile_context>

<pallas_src>
import functools

import numpy as np

import jax
import jax.numpy as jnp
from jax.experimental import pallas as pl
from jax.experimental.pallas import tpu as pltpu

POOLING_BREAKDOWN = {1: (1, 1), 2: (2, 1), 3: (3, 1), 4: (2, 2), 5: (5, 1),
                     6: (3, 2), 7: (7, 1), 8: (4, 2), 9: (3, 3)}

_LANE = 128
_SUBLANE = 8


def _round_up(x, m):
    return ((x + m - 1) // m) * m


def _vmem_capacity_bytes():
    """Per-core VMEM capacity; conservative 64 MiB (v7x) fallback."""
    try:
        return int(pltpu.get_tpu_info().vmem_capacity_bytes)
    except Exception:
        return 64 << 20


def _tile_vmem_bytes(th, H, W, cin_pad, co_tile, n_pad):
    """Rough per-grid-step live VMEM (inputs double-buffered, intermediates)."""
    m = th * W
    patches = m * 9 * cin_pad * 2                       # bf16 im2col tile
    feat = m * co_tile * (4 + 2)                        # f32 feat + bf16 copy
    x_blk = 2 * (H + 2) * (W + 2) * cin_pad * 2         # padded image block
    w_blk = 2 * 9 * cin_pad * co_tile * 2               # weight block
    p_blk = 2 * n_pad * m * 2                           # pool indicator block
    out_b = 3 * n_pad * co_tile * 4                     # out dbl-buf + f32 acc
    misc = 2 * (co_tile * 4 + n_pad * 4)                # bias + scale
    return patches + feat + x_blk + w_blk + p_blk + out_b + misc


def _pick_row_tile(H, W, max_rows, tile_bytes_fn, budget_bytes):
    """Largest divisor of H that fits the VMEM budget (prefer th*W<=max_rows)."""
    divs = [d for d in range(1, H + 1) if H % d == 0]
    fit_vmem = [d for d in divs if tile_bytes_fn(d) <= budget_bytes]
    if not fit_vmem:
        raise ValueError(
            "ImageEncoder Pallas kernel: even a 1-row tile exceeds the "
            "per-tile VMEM budget; reduce feature channels or image width.")
    preferred = [d for d in fit_vmem if d * W <= max_rows]
    return max(preferred) if preferred else min(fit_vmem)


def _pool_indicator_tiles(H, W, h_out, w_out, th, n_t, n_pad):
    """Exact 0/1 bf16 indicator (n_t, n_pad, th*W) + f32 1/area scales.

    Row n = bin (oh*w_out + ow) with PyTorch's floor/ceil adaptive bounds,
    restricted to the feature rows covered by row-tile t.  The 1/area scale is
    kept separate (f32) and applied at finalize so averaging stays exact while
    the matmul runs on the fast bf16 MXU path."""
    P = np.zeros((n_t, n_pad, th * W), np.float32)
    s = np.zeros((n_pad, 1), np.float32)
    for oh in range(h_out):
        sh, eh = (oh * H) // h_out, -(-((oh + 1) * H) // h_out)
        for ow in range(w_out):
            sw, ew = (ow * W) // w_out, -(-((ow + 1) * W) // w_out)
            n = oh * w_out + ow
            s[n, 0] = 1.0 / float((eh - sh) * (ew - sw))
            for hh in range(sh, eh):
                t, hl = hh // th, hh % th
                P[t, n, hl * W + sw:hl * W + ew] = 1.0
    return jnp.asarray(P, dtype=jnp.bfloat16), jnp.asarray(s, dtype=jnp.float32)


# ----------------------------------------------------------------------------
# Fused kernel: in-VMEM im2col -> one K=9*Cin_pad bf16 MXU matmul (f32 acc)
# -> bias + ReLU -> bf16 indicator pool matmul -> f32 accumulator over row
# tiles -> per-bin 1/area scale + single dense store at finalize.
# ----------------------------------------------------------------------------
def _fused_conv_pool_kernel(x_ref, w_ref, b_ref, p_ref, s_ref, o_ref, acc_ref,
                            *, th, w_img, cin_pad):
    t = pl.program_id(2)

    @pl.when(t == 0)
    def _init():
        acc_ref[...] = jnp.zeros_like(acc_ref)

    # Row tile with a 1-row halo on each side (whole padded image lives in the
    # x block; no wrapper-side halo copies in HBM).
    rs = t * th
    xt = x_ref[0, pl.ds(rs, th + 2), :, :]            # (th+2, W+2, Cin_pad) bf16

    # In-VMEM im2col: 9 shifted views concatenated lane-wise -> (th*W, 9*Cin_pad).
    cols = []
    for dh in range(3):
        for dw in range(3):
            cols.append(xt[dh:dh + th, dw:dw + w_img, :]
                        .reshape(th * w_img, cin_pad))
    patches = jnp.concatenate(cols, axis=1)           # (th*W, 9*Cin_pad) bf16

    # Single K = 9*Cin_pad bf16 matmul with f32 accumulation, then bias + ReLU.
    feat = jnp.dot(patches, w_ref[...], preferred_element_type=jnp.float32)
    feat = jnp.maximum(feat + b_ref[...], 0.0)         # (th*W, co_tile) f32
    feat_b = feat.astype(jnp.bfloat16)                 # bf16 for the pool MXU op

    # Adaptive-avg-pool partial sums: 0/1 bf16 indicator matmul, f32 accumulate.
    acc_ref[...] += jnp.dot(p_ref[0], feat_b, preferred_element_type=jnp.float32)

    @pl.when(t == pl.num_programs(2) - 1)
    def _store():
        # Exact f32 per-bin 1/area scale, single lane-dense store.
        o_ref[0] = (acc_ref[...] * s_ref[...]).astype(o_ref.dtype)


def image_encoder_forward(x_nchw, w, b, h_out, w_out, *, m_tile_rows=2048):
    """x_nchw: (B, Cin, H, W) -> (B, h_out*w_out, Cout). PyTorch semantics."""
    B, Cin, H, W = x_nchw.shape
    Cout = w.shape[-1]
    N = h_out * w_out
    n_pad = _round_up(max(N, _SUBLANE), _SUBLANE)
    cout_pad = _round_up(Cout, _LANE)
    # 256-wide N tiles fill the v6e/v7x MXU; 128 otherwise (and on v5e this is
    # simply two native passes).
    co_tile = 256 if cout_pad % 256 == 0 else _LANE
    n_co = cout_pad // co_tile
    cin_pad = _round_up(Cin, _SUBLANE)   # dense-ish lanes; padded chans are zero

    capacity = _vmem_capacity_bytes()
    tile_bytes_fn = functools.partial(_tile_vmem_bytes, H=H, W=W,
                                      cin_pad=cin_pad, co_tile=co_tile,
                                      n_pad=n_pad)
    th = _pick_row_tile(H, W, m_tile_rows, tile_bytes_fn, capacity // 4)
    n_t = H // th
    tile_bytes = tile_bytes_fn(th)
    vmem_limit = max(16 << 20,
                     int(min(3 * tile_bytes + (32 << 20), capacity - (8 << 20))))

    # NCHW -> NHWC in bf16 (half the boundary HBM traffic); pad channels to
    # cin_pad (zeros) and spatial dims by 1 for the 'same' conv halo.
    x = jnp.transpose(x_nchw.astype(jnp.bfloat16), (0, 2, 3, 1))
    xp = jnp.pad(x, ((0, 0), (1, 1), (1, 1), (0, cin_pad - Cin)))

    # Weights: (3,3,Cin,Cout) -> (9*Cin_pad, Cout_pad) bf16; padded rows/cols 0.
    w9 = jnp.pad(w.astype(jnp.bfloat16).reshape(9, Cin, Cout),
                 ((0, 0), (0, cin_pad - Cin), (0, cout_pad - Cout)))
    wmat = w9.reshape(9 * cin_pad, cout_pad)
    bvec = jnp.pad(b.astype(jnp.float32),
                   (0, cout_pad - Cout)).reshape(1, cout_pad)
    pmat, svec = _pool_indicator_tiles(H, W, h_out, w_out, th, n_t, n_pad)

    kernel = functools.partial(_fused_conv_pool_kernel,
                               th=th, w_img=W, cin_pad=cin_pad)

    flops = (2 * B * H * W * 9 * cin_pad * cout_pad
             + 2 * B * n_pad * H * W * cout_pad)
    bytes_accessed = (xp.size * 2 + wmat.size * 2 + bvec.size * 4
                      + pmat.size * 2 + svec.size * 4
                      + B * n_pad * cout_pad * 4)

    out = pl.pallas_call(
        kernel,
        out_shape=jax.ShapeDtypeStruct((B, n_pad, cout_pad), jnp.float32),
        grid=(B, n_co, n_t),
        in_specs=[
            # whole padded image per batch; constant across (co, row-tile) so
            # it is only DMA'd when the batch index changes.
            pl.BlockSpec((1, H + 2, W + 2, cin_pad),
                         lambda bi, ji, ti: (bi, 0, 0, 0)),
            pl.BlockSpec((9 * cin_pad, co_tile), lambda bi, ji, ti: (0, ji)),
            pl.BlockSpec((1, co_tile), lambda bi, ji, ti: (0, ji)),
            pl.BlockSpec((1, n_pad, th * W), lambda bi, ji, ti: (ti, 0, 0)),
            pl.BlockSpec((n_pad, 1), lambda bi, ji, ti: (0, 0)),
        ],
        out_specs=pl.BlockSpec((1, n_pad, co_tile),
                               lambda bi, ji, ti: (bi, 0, ji)),
        scratch_shapes=[pltpu.VMEM((n_pad, co_tile), jnp.float32)],
        compiler_params=pltpu.CompilerParams(
            dimension_semantics=("parallel", "parallel", "arbitrary"),
            vmem_limit_bytes=vmem_limit),
        cost_estimate=pl.CostEstimate(flops=flops, transcendentals=0,
                                      bytes_accessed=bytes_accessed),
    )(xp, wmat, bvec, pmat, svec)

    # Slice off lane / sublane padding (tiny).
    return out[:, :N, :Cout]


# ----------------------------------------------------------------------------
# Module wrapper
# ----------------------------------------------------------------------------
class ImageEncoderPallas:
    """Pallas TPU ImageEncoder: synthetic conv backbone + exact
    AdaptiveAvgPool2d(POOLING_BREAKDOWN[n]) + flatten(2) + transpose(1, 2)."""

    def __init__(self, num_image_embeds, in_channels, feat_channels, key,
                 m_tile_rows=2048):
        self.h_out, self.w_out = POOLING_BREAKDOWN[num_image_embeds]
        self.m_tile_rows = m_tile_rows
        kw, kb = jax.random.split(key)
        # deterministic synthetic "backbone" parameters
        self.w = (jax.random.normal(kw, (3, 3, in_channels, feat_channels),
                                    dtype=jnp.float32) * 0.1)
        self.b = (jax.random.normal(kb, (feat_channels,), dtype=jnp.float32) * 0.1)

    def __call__(self, x_nchw, m_tile_rows=None):
        mt = self.m_tile_rows if m_tile_rows is None else m_tile_rows
        return image_encoder_forward(x_nchw, self.w, self.b,
                                     self.h_out, self.w_out, m_tile_rows=mt)


# ----------------------------------------------------------------------------
# Reference (pure JAX) for numerical verification of the Pallas path.
# Matches kernel numerics: bf16 conv operands, f32 acc, bf16 feat into the pool.
# ----------------------------------------------------------------------------
def _reference_forward(x_nchw, w, b, h_out, w_out):
    x = jnp.transpose(x_nchw.astype(jnp.bfloat16), (0, 2, 3, 1))
    B, H, W, Cin = x.shape
    xp = jnp.pad(x, ((0, 0), (1, 1), (1, 1), (0, 0)))
    cols = [xp[:, dh:dh + H, dw:dw + W, :] for dh in range(3) for dw in range(3)]
    patches = jnp.concatenate(cols, axis=-1).reshape(B * H * W, 9 * Cin)
    wmat = w.astype(jnp.bfloat16).reshape(9 * Cin, -1)
    feat = jnp.dot(patches, wmat, preferred_element_type=jnp.float32) + b
    feat = jnp.maximum(feat, 0.0)
    feat = feat.astype(jnp.bfloat16).astype(jnp.float32).reshape(B, H, W, -1)
    rows = []
    for oh in range(h_out):
        sh, eh = (oh * H) // h_out, -(-((oh + 1) * H) // h_out)
        for ow in range(w_out):
            sw, ew = (ow * W) // w_out, -(-((ow + 1) * W) // w_out)
            rows.append(jnp.mean(feat[:, sh:eh, sw:ew, :], axis=(1, 2)))
    return jnp.stack(rows, axis=1)  # (B, N, Cf)


if __name__ == "__main__":
    key = jax.random.PRNGKey(0)
    k_x, k_p = jax.random.split(key)

    B, C_in, H, W = 2, 4, 16, 16
    C_feat = 32
    num_image_embeds = 3          # -> AdaptiveAvgPool2d((3, 1))

    x = jax.random.normal(k_x, (B, C_in, H, W), dtype=jnp.float32)

    enc = ImageEncoderPallas(num_image_embeds, C_in, C_feat, k_p)

    # Default: one row-tile per image.  m_tile_rows=128 forces two row tiles,
    # exercising the accumulator init/accumulate/finalize path over the grid.
    out_single = jax.block_until_ready(enc(x))
    out_multi = jax.block_until_ready(enc(x, m_tile_rows=128))

    expected_n = enc.h_out * enc.w_out
    assert out_single.shape == (B, expected_n, C_feat), out_single.shape
    assert out_multi.shape == (B, expected_n, C_feat), out_multi.shape
    assert out_single.dtype == jnp.float32

    ref = _reference_forward(x, enc.w, enc.b, enc.h_out, enc.w_out)
    err_s = float(jnp.max(jnp.abs(out_single - ref)))
    err_m = float(jnp.max(jnp.abs(out_multi - ref)))
    assert err_s < 2e-3, err_s
    assert err_m < 2e-3, err_m
    assert float(jnp.max(jnp.abs(out_single - out_multi))) < 2e-3

    print("KERNEL_OK")
</pallas_src>

<mosaic_0001>
module attributes {stable_mosaic.version = 11 : i64} {
  func.func @_fused_conv_pool_kernel(%arg0: i32, %arg1: i32, %arg2: i32, %arg3: memref<1x18x18x8xbf16, #tpu.memory_space<vmem>>, %arg4: memref<72x128xbf16, #tpu.memory_space<vmem>>, %arg5: memref<1x128xf32, #tpu.memory_space<vmem>>, %arg6: memref<1x8x256xbf16, #tpu.memory_space<vmem>>, %arg7: memref<8x1xf32, #tpu.memory_space<vmem>>, %arg8: memref<1x8x128xf32, #tpu.memory_space<vmem>>, %arg9: memref<8x128xf32, #tpu.memory_space<vmem>>) attributes {dimension_semantics = [#tpu.dimension_semantics<parallel>, #tpu.dimension_semantics<parallel>, #tpu.dimension_semantics<arbitrary>], iteration_bounds = array<i64: 2, 1, 1>, scalar_prefetch = 0 : i64, scratch_operands = 1 : i64, tpu.core_type = #tpu.core_type<tc>, window_params = [{transform_indices = @transform_0, window_bounds = array<i64: 1, 18, 18, 8>}, {transform_indices = @transform_1, window_bounds = array<i64: 72, 128>}, {transform_indices = @transform_2, window_bounds = array<i64: 1, 128>}, {transform_indices = @transform_3, window_bounds = array<i64: 1, 8, 256>}, {pipeline_mode = #tpu.pipeline_mode<synchronous>, transform_indices = @transform_4, window_bounds = array<i64: 8, 1>}, {transform_indices = @transform_5, window_bounds = array<i64: 1, 8, 128>}]} {
    %c0_i32 = arith.constant 0 : i32
    %0 = arith.cmpi eq, %arg2, %c0_i32 : i32
    %1 = arith.extui %0 : i1 to i32
    %c0_i32_0 = arith.constant 0 : i32
    %2 = arith.cmpi ne, %1, %c0_i32_0 : i32
    scf.if %2 {
      %cst_18 = arith.constant 0.000000e+00 : f32
      %43 = vector.broadcast %cst_18 : f32 to vector<8x128xf32>
      %c0_19 = arith.constant 0 : index
      %c0_20 = arith.constant 0 : index
      %44 = vector.load %arg9[%c0_19, %c0_20] : memref<8x128xf32, #tpu.memory_space<vmem>>, vector<8x128xf32>
      tpu.vector_store %arg9[%c0_19, %c0_20], %43 {strides = array<i32>} : memref<8x128xf32, #tpu.memory_space<vmem>>, vector<8x128xf32>,
    } else {
    }
    %c16_i32 = arith.constant 16 : i32
    %3 = arith.muli %arg2, %c16_i32 : i32
    %c0 = arith.constant 0 : index
    %4 = arith.index_cast %3 : i32 to index
    %c0_1 = arith.constant 0 : index
    %c0_2 = arith.constant 0 : index
    %5 = vector.load %arg3[%c0, %4, %c0_1, %c0_2] : memref<1x18x18x8xbf16, #tpu.memory_space<vmem>>, vector<1x18x18x8xbf16>
    %6 = vector.shape_cast %5 : vector<1x18x18x8xbf16> to vector<18x18x8xbf16>
    %7 = vector.extract_strided_slice %6 {offsets = [0, 0, 0], sizes = [16, 16, 8], strides = [1, 1, 1]} : vector<18x18x8xbf16> to vector<16x16x8xbf16>
    %8 = vector.shape_cast %7 : vector<16x16x8xbf16> to vector<256x8xbf16>
    %9 = vector.extract_strided_slice %6 {offsets = [0, 1, 0], sizes = [16, 16, 8], strides = [1, 1, 1]} : vector<18x18x8xbf16> to vector<16x16x8xbf16>
    %10 = vector.shape_cast %9 : vector<16x16x8xbf16> to vector<256x8xbf16>
    %11 = vector.extract_strided_slice %6 {offsets = [0, 2, 0], sizes = [16, 16, 8], strides = [1, 1, 1]} : vector<18x18x8xbf16> to vector<16x16x8xbf16>
    %12 = vector.shape_cast %11 : vector<16x16x8xbf16> to vector<256x8xbf16>
    %13 = vector.extract_strided_slice %6 {offsets = [1, 0, 0], sizes = [16, 16, 8], strides = [1, 1, 1]} : vector<18x18x8xbf16> to vector<16x16x8xbf16>
    %14 = vector.shape_cast %13 : vector<16x16x8xbf16> to vector<256x8xbf16>
    %15 = vector.extract_strided_slice %6 {offsets = [1, 1, 0], sizes = [16, 16, 8], strides = [1, 1, 1]} : vector<18x18x8xbf16> to vector<16x16x8xbf16>
    %16 = vector.shape_cast %15 : vector<16x16x8xbf16> to vector<256x8xbf16>
    %17 = vector.extract_strided_slice %6 {offsets = [1, 2, 0], sizes = [16, 16, 8], strides = [1, 1, 1]} : vector<18x18x8xbf16> to vector<16x16x8xbf16>
    %18 = vector.shape_cast %17 : vector<16x16x8xbf16> to vector<256x8xbf16>
    %19 = vector.extract_strided_slice %6 {offsets = [2, 0, 0], sizes = [16, 16, 8], strides = [1, 1, 1]} : vector<18x18x8xbf16> to vector<16x16x8xbf16>
    %20 = vector.shape_cast %19 : vector<16x16x8xbf16> to vector<256x8xbf16>
    %21 = vector.extract_strided_slice %6 {offsets = [2, 1, 0], sizes = [16, 16, 8], strides = [1, 1, 1]} : vector<18x18x8xbf16> to vector<16x16x8xbf16>
    %22 = vector.shape_cast %21 : vector<16x16x8xbf16> to vector<256x8xbf16>
    %23 = vector.extract_strided_slice %6 {offsets = [2, 2, 0], sizes = [16, 16, 8], strides = [1, 1, 1]} : vector<18x18x8xbf16> to vector<16x16x8xbf16>
    %24 = vector.shape_cast %23 : vector<16x16x8xbf16> to vector<256x8xbf16>
    %25 = tpu.concatenate %8, %10, %12, %14, %16, %18, %20, %22, %24 in 1 : vector<256x8xbf16>, vector<256x8xbf16>, vector<256x8xbf16>, vector<256x8xbf16>, vector<256x8xbf16>, vector<256x8xbf16>, vector<256x8xbf16>, vector<256x8xbf16>, vector<256x8xbf16> -> vector<256x72xbf16>
    %c0_3 = arith.constant 0 : index
    %c0_4 = arith.constant 0 : index
    %26 = vector.load %arg4[%c0_3, %c0_4] : memref<72x128xbf16, #tpu.memory_space<vmem>>, vector<72x128xbf16>
    %cst = arith.constant dense<0.000000e+00> : vector<256x128xf32>
    %27 = tpu.matmul %25, %26, %cst {dimension_numbers = #tpu.dot_dimension_numbers<[1], [0], [0], [1], [0, 0, 1, 1], [], []>} : vector<256x72xbf16>, vector<72x128xbf16>, vector<256x128xf32> -> vector<256x128xf32>
    %c0_5 = arith.constant 0 : index
    %c0_6 = arith.constant 0 : index
    %28 = vector.load %arg5[%c0_5, %c0_6] : memref<1x128xf32, #tpu.memory_space<vmem>>, vector<1x128xf32>
    %29 = vector.broadcast %28 : vector<1x128xf32> to vector<256x128xf32>
    %30 = arith.addf %27, %29 : vector<256x128xf32>
    %cst_7 = arith.constant 0.000000e+00 : f32
    %31 = vector.broadcast %cst_7 : f32 to vector<256x128xf32>
    %32 = arith.maximumf %30, %31 : vector<256x128xf32>
    %33 = arith.truncf %32 : vector<256x128xf32> to vector<256x128xbf16>
    %c0_8 = arith.constant 0 : index
    %c0_9 = arith.constant 0 : index
    %34 = vector.load %arg9[%c0_8, %c0_9] : memref<8x128xf32, #tpu.memory_space<vmem>>, vector<8x128xf32>
    %c0_10 = arith.constant 0 : index
    %c0_11 = arith.constant 0 : index
    %c0_12 = arith.constant 0 : index
    %35 = vector.load %arg6[%c0_10, %c0_11, %c0_12] : memref<1x8x256xbf16, #tpu.memory_space<vmem>>, vector<1x8x256xbf16>
    %36 = vector.shape_cast %35 : vector<1x8x256xbf16> to vector<8x256xbf16>
    %cst_13 = arith.constant dense<0.000000e+00> : vector<8x128xf32>
    %37 = tpu.matmul %36, %33, %cst_13 {dimension_numbers = #tpu.dot_dimension_numbers<[1], [0], [0], [1], [0, 0, 1, 1], [], []>} : vector<8x256xbf16>, vector<256x128xbf16>, vector<8x128xf32> -> vector<8x128xf32>
    %38 = arith.addf %34, %37 : vector<8x128xf32>
    %c0_14 = arith.constant 0 : index
    %c0_15 = arith.constant 0 : index
    %39 = vector.load %arg9[%c0_14, %c0_15] : memref<8x128xf32, #tpu.memory_space<vmem>>, vector<8x128xf32>
    tpu.vector_store %arg9[%c0_14, %c0_15], %38 {strides = array<i32>} : memref<8x128xf32, #tpu.memory_space<vmem>>, vector<8x128xf32>,
    %c0_i32_16 = arith.constant 0 : i32
    %40 = arith.cmpi eq, %arg2, %c0_i32_16 : i32
    %41 = arith.extui %40 : i1 to i32
    %c0_i32_17 = arith.constant 0 : i32
    %42 = arith.cmpi ne, %41, %c0_i32_17 : i32
    scf.if %42 {
      %c0_18 = arith.constant 0 : index
      %c0_19 = arith.constant 0 : index
      %43 = vector.load %arg9[%c0_18, %c0_19] : memref<8x128xf32, #tpu.memory_space<vmem>>, vector<8x128xf32>
      %c0_20 = arith.constant 0 : index
      %c0_21 = arith.constant 0 : index
      %44 = vector.load %arg7[%c0_20, %c0_21] : memref<8x1xf32, #tpu.memory_space<vmem>>, vector<8x1xf32>
      %45 = vector.broadcast %44 : vector<8x1xf32> to vector<8x128xf32>
      %46 = arith.mulf %43, %45 : vector<8x128xf32>
      %c0_22 = arith.constant 0 : index
      %c0_23 = arith.constant 0 : index
      %c0_24 = arith.constant 0 : index
      %47 = vector.load %arg8[%c0_22, %c0_23, %c0_24] : memref<1x8x128xf32, #tpu.memory_space<vmem>>, vector<1x8x128xf32>
      %48 = vector.shape_cast %47 : vector<1x8x128xf32> to vector<8x128xf32>
      %49 = vector.shape_cast %46 : vector<8x128xf32> to vector<1x8x128xf32>
      tpu.vector_store %arg8[%c0_22, %c0_23, %c0_24], %49 {strides = array<i32>} : memref<1x8x128xf32, #tpu.memory_space<vmem>>, vector<1x8x128xf32>,
    } else {
    }
    return
  }
  func.func @transform_0(%arg0: i32, %arg1: i32, %arg2: i32) -> (i32, i32, i32, i32) {
    %c0_i32 = arith.constant 0 : i32
    %c0_i32_0 = arith.constant 0 : i32
    %c0_i32_1 = arith.constant 0 : i32
    %c0_i32_2 = arith.constant 0 : i32
    return %arg0, %c0_i32, %c0_i32_0, %c0_i32_1 : i32, i32, i32, i32
  }
  func.func @transform_1(%arg0: i32, %arg1: i32, %arg2: i32) -> (i32, i32) {
    %c0_i32 = arith.constant 0 : i32
    %c0_i32_0 = arith.constant 0 : i32
    return %c0_i32, %arg1 : i32, i32
  }
  func.func @transform_2(%arg0: i32, %arg1: i32, %arg2: i32) -> (i32, i32) {
    %c0_i32 = arith.constant 0 : i32
    %c0_i32_0 = arith.constant 0 : i32
    return %c0_i32, %arg1 : i32, i32
  }
  func.func @transform_3(%arg0: i32, %arg1: i32, %arg2: i32) -> (i32, i32, i32) {
    %c0_i32 = arith.constant 0 : i32
    %c0_i32_0 = arith.constant 0 : i32
    %c0_i32_1 = arith.constant 0 : i32
    return %arg2, %c0_i32, %c0_i32_0 : i32, i32, i32
  }
  func.func @transform_4(%arg0: i32, %arg1: i32, %arg2: i32) -> (i32, i32) {
    %c0_i32 = arith.constant 0 : i32
    %c0_i32_0 = arith.constant 0 : i32
    %c0_i32_1 = arith.constant 0 : i32
    return %c0_i32, %c0_i32_0 : i32, i32
  }
  func.func @transform_5(%arg0: i32, %arg1: i32, %arg2: i32) -> (i32, i32, i32) {
    %c0_i32 = arith.constant 0 : i32
    %c0_i32_0 = arith.constant 0 : i32
    return %arg0, %c0_i32, %arg1 : i32, i32, i32
  }
}

</mosaic_0001>

<llo_original>
// kernel: tpu_custom_call.1
$region0: #{tpu_custom_call.1}
  #allocation0 [shape = 'u32[]', space=smem, size = 0x4, offset = 0x4, fixed_abs, tag = 'smem constant byte address 0x4 - core index']
  #allocation1 [shape = 'u32[72,128]{1,0:T(1,128)}', space=vmem, size = 0x9000, scoped, tag = 'internal scratch']
  #allocation2 [shape = 'f32[8,128]{1,0:T(8,128)}', space=vmem, size = 0x1000, scoped, tag = 'scratch operand']
  %s0 = inlined_call_operand.vmem [shape: bf16[2,18,18,8], index: 0, kind: input, shape index: {}]
  %s1 = inlined_call_operand.vmem [shape: bf16[72,128], index: 1, kind: input, shape index: {}]
  %s2 = inlined_call_operand.vmem [shape: f32[1,128], index: 2, kind: input, shape index: {}]
  %s3 = inlined_call_operand.vmem [shape: bf16[1,8,256], index: 3, kind: input, shape index: {}]
  %s4 = inlined_call_operand.vmem [shape: f32[8,1], index: 4, kind: input, shape index: {}]
  %s5 = inlined_call_operand.hbm [shape: f32[2,8,128], index: 5, kind: output, shape index: {}]
  %s6 = sld [smem:[#allocation0]]
  $region61: #{tpu_custom_call.1} parent=0
    _
  %s8 = ssub.s32 1, %s6
  %s9 = scalar_select 0, %s8, %s6
  $region1: #{tpu_custom_call.1} parent=0
    #allocation3 [shape = 'u8[8192]{0}', space=vmem, size = 0x2000, scoped, tag = 'output window, operand 0']
    #allocation4 [shape = 's32[2]{0}', space=sflag, size = 0x8, scoped, tag = 'scoped memory for tpu_custom_call.1']
    %10 = vsyncpa [#allocation4], 0
    %s11 = scalar_lea.sflag [#allocation4], 1
    %12 = vsyncpa %s11, 0
    loop: start=0, step=1, limit=4
    $region2: #{tpu_custom_call.1} parent=1 // loop_pre_header
      _
    $region3: #{tpu_custom_call.1} parent=1 // loop_header
      %s14 = sphi 0, %s18
      %p15 = scmp.ge.s32.totalorder %s14, 4
      %s21 = sphi 0, %s40
      %s22 = sphi 0, %s36
      %s23 = sphi 0, %s32
      %s24 = sphi 0, %s21
      %s25 = sphi 0, %s22
      %s26 = sphi 0, %s23
      %s27 = sphi 0, %s24
      %s28 = sphi 0, %s25
      %s29 = sphi 0, %s26
      %s43 = sphi 0, %s45
      %s46 = sphi 0, %s43
      %s47 = sphi 0, %s46
      %s63 = sphi 0, %s47
      %s69 = sphi 0, %s71
      %s72 = sphi 0, %s69
      %s73 = sphi 0, %s72
      %s89 = sphi 0, %s73
      %s95 = sphi 0, %s97
      %s98 = sphi 0, %s95
      %s99 = sphi 0, %s98
      %s115 = sphi 0, %s99
      %s121 = sphi 0, %s123
      %s124 = sphi 0, %s121
      %s125 = sphi 0, %s124
      %s141 = sphi 0, %s125
      %s145 = sphi 0, %s145
      %s147 = sphi 0, %s145
      %s148 = sphi 0, %s147
      %s162 = sphi 0, %s148
      %s170 = sphi 0, %s172
      %s173 = sphi 0, %s170
      %s174 = sphi 0, %s173
      %s190 = sphi 0, %s174
    $region4: #{tpu_custom_call.1} parent=1 // loop_header_branch
      %17 = sbr.rel (%p15) target = $region8
    $region5: #{tpu_custom_call.1} parent=1 // loop_body
      %s19 = ssub.s32 %s14, 1
      %s20 = ssub.s32 %s14, 2
      %s30 = sadd.s32 1, %s23
      %p31 = scmp.ge.s32.totalorder %s30, 1
      %s32 = scalar_select %p31, 0, %s30
      %s33 = sadd.s32 1, %s22
      %s34 = scalar_select %p31, %s33, %s22
      %p35 = scmp.ge.s32.totalorder %s34, 1
      %s36 = scalar_select %p35, 0, %s34
      %s37 = sadd.s32 1, %s21
      %s38 = scalar_select %p35, %s37, %s21
      %p39 = scmp.ge.s32.totalorder %s38, 2
      %s40 = scalar_select %p39, 0, %s38
      %s41 = ssub.s32 %s21, %s40
      %p42 = scmp.eq.s32.totalorder %s41, 0
      %s44 = sadd.s32 %s43, 1
      %s45 = scalar_select %p42, %s43, %s44
      %p48 = pneg %p42
      %p49 = scmp.eq.s32.totalorder %s14, 1
      %p50 = por %p48, %p49
      %p51 = scmp.ne.s32.totalorder %s43, %s46
      %p52 = scmp.eq.s32.totalorder %s14, 0
      %p53 = por %p51, %p52
      %p54 = scmp.ne.s32.totalorder %s43, %s46
      %p55 = scmp.eq.s32.totalorder %s19, 1
      %p56 = por %p54, %p55
      %p57 = scmp.ne.s32.totalorder %s46, %s47
      %p58 = scmp.eq.s32.totalorder %s19, 0
      %p59 = por %p57, %p58
      %p60 = scmp.ne.s32.totalorder %s46, %s47
      %p61 = scmp.eq.s32.totalorder %s20, 1
      %p62 = por %p60, %p61
      %p64 = scmp.ne.s32.totalorder %s47, %s63
      %p65 = scmp.eq.s32.totalorder %s20, 0
      %p66 = por %p64, %p65
      %s67 = ssub.s32 %s22, %s36
      %p68 = scmp.eq.s32.totalorder %s67, 0
      %s70 = sadd.s32 %s69, 1
      %s71 = scalar_select %p68, %s69, %s70
      %p74 = pneg %p68
      %p75 = scmp.eq.s32.totalorder %s14, 1
      %p76 = por %p74, %p75
      %p77 = scmp.ne.s32.totalorder %s69, %s72
      %p78 = scmp.eq.s32.totalorder %s14, 0
      %p79 = por %p77, %p78
      %p80 = scmp.ne.s32.totalorder %s69, %s72
      %p81 = scmp.eq.s32.totalorder %s19, 1
      %p82 = por %p80, %p81
      %p83 = scmp.ne.s32.totalorder %s72, %s73
      %p84 = scmp.eq.s32.totalorder %s19, 0
      %p85 = por %p83, %p84
      %p86 = scmp.ne.s32.totalorder %s72, %s73
      %p87 = scmp.eq.s32.totalorder %s20, 1
      %p88 = por %p86, %p87
      %p90 = scmp.ne.s32.totalorder %s73, %s89
      %p91 = scmp.eq.s32.totalorder %s20, 0
      %p92 = por %p90, %p91
      %s93 = ssub.s32 %s22, %s36
      %p94 = scmp.eq.s32.totalorder %s93, 0
      %s96 = sadd.s32 %s95, 1
      %s97 = scalar_select %p94, %s95, %s96
      %p100 = pneg %p94
      %p101 = scmp.eq.s32.totalorder %s14, 1
      %p102 = por %p100, %p101
      %p103 = scmp.ne.s32.totalorder %s95, %s98
      %p104 = scmp.eq.s32.totalorder %s14, 0
      %p105 = por %p103, %p104
      %p106 = scmp.ne.s32.totalorder %s95, %s98
      %p107 = scmp.eq.s32.totalorder %s19, 1
      %p108 = por %p106, %p107
      %p109 = scmp.ne.s32.totalorder %s98, %s99
      %p110 = scmp.eq.s32.totalorder %s19, 0
      %p111 = por %p109, %p110
      %p112 = scmp.ne.s32.totalorder %s98, %s99
      %p113 = scmp.eq.s32.totalorder %s20, 1
      %p114 = por %p112, %p113
      %p116 = scmp.ne.s32.totalorder %s99, %s115
      %p117 = scmp.eq.s32.totalorder %s20, 0
      %p118 = por %p116, %p117
      %s119 = ssub.s32 %s23, %s32
      %p120 = scmp.eq.s32.totalorder %s119, 0
      %s122 = sadd.s32 %s121, 1
      %s123 = scalar_select %p120, %s121, %s122
      %p126 = pneg %p120
      %p127 = scmp.eq.s32.totalorder %s14, 1
      %p128 = por %p126, %p127
      %p129 = scmp.ne.s32.totalorder %s121, %s124
      %p130 = scmp.eq.s32.totalorder %s14, 0
      %p131 = por %p129, %p130
      %p132 = scmp.ne.s32.totalorder %s121, %s124
      %p133 = scmp.eq.s32.totalorder %s19, 1
      %p134 = por %p132, %p133
      %p135 = scmp.ne.s32.totalorder %s124, %s125
      %p136 = scmp.eq.s32.totalorder %s19, 0
      %p137 = por %p135, %p136
      %p138 = scmp.ne.s32.totalorder %s124, %s125
      %p139 = scmp.eq.s32.totalorder %s20, 1
      %p140 = por %p138, %p139
      %p142 = scmp.ne.s32.totalorder %s125, %s141
      %p143 = scmp.eq.s32.totalorder %s20, 0
      %p144 = por %p142, %p143
      %s146 = sadd.s32 %s145, 1
      %p149 = scmp.eq.s32.totalorder %s14, 1
      %p150 = scmp.ne.s32.totalorder %s145, %s147
      %p151 = scmp.eq.s32.totalorder %s14, 0
      %p152 = por %p150, %p151
      %p153 = scmp.ne.s32.totalorder %s145, %s147
      %p154 = scmp.eq.s32.totalorder %s19, 1
      %p155 = por %p153, %p154
      %p156 = scmp.ne.s32.totalorder %s147, %s148
      %p157 = scmp.eq.s32.totalorder %s19, 0
      %p158 = por %p156, %p157
      %p159 = scmp.ne.s32.totalorder %s147, %s148
      %p160 = scmp.eq.s32.totalorder %s20, 1
      %p161 = por %p159, %p160
      %p163 = scmp.ne.s32.totalorder %s148, %s162
      %p164 = scmp.eq.s32.totalorder %s20, 0
      %p165 = por %p163, %p164
      %s166 = ssub.s32 %s21, %s40
      %s167 = ssub.s32 %s22, %s36
      %s168 = sor.u32 %s166, %s167
      %p169 = scmp.eq.s32.totalorder %s168, 0
      %s171 = sadd.s32 %s170, 1
      %s172 = scalar_select %p169, %s170, %s171
      %p175 = pneg %p169
      %p176 = scmp.eq.s32.totalorder %s14, 1
      %p177 = por %p175, %p176
      %p178 = scmp.ne.s32.totalorder %s170, %s173
      %p179 = scmp.eq.s32.totalorder %s14, 0
      %p180 = por %p178, %p179
      %p181 = scmp.ne.s32.totalorder %s170, %s173
      %p182 = scmp.eq.s32.totalorder %s19, 1
      %p183 = por %p181, %p182
      %p184 = scmp.ne.s32.totalorder %s173, %s174
      %p185 = scmp.eq.s32.totalorder %s19, 0
      %p186 = por %p184, %p185
      %p187 = scmp.ne.s32.totalorder %s173, %s174
      %p188 = scmp.eq.s32.totalorder %s20, 1
      %p189 = por %p187, %p188
      %p191 = scmp.ne.s32.totalorder %s174, %s190
      %p192 = scmp.eq.s32.totalorder %s20, 0
      %p193 = por %p191, %p192
      %p194 = scmp.le.s32.totalorder 1, %s14
      %p195 = scmp.lt.s32.totalorder %s14, 3
      %p196 = pnand %p194, %p195
      %p197 = pneg %p196
      // Predicated region
      $region9: #{tpu_custom_call.1} parent=5 // pred_check
        _
      $region10: #{tpu_custom_call.1} parent=5 // pred_check_branch
        %199 = sbr.rel (%p196) target = $region12
      $region11: #{tpu_custom_call.1} parent=5 // pred_region
        %s200 = ssub.s32 %s14, 1
        // Predicated region
        $region13: #{tpu_custom_call.1} parent=11 // pred_check
          %p201 = pneg %p85
        $region14: #{tpu_custom_call.1} parent=11 // pred_check_branch
          %203 = sbr.rel (%p201) target = $region16
        $region15: #{tpu_custom_call.1} parent=11 // pred_region
          %p204 = scmp.lt.s32.totalorder %s25, 0
          %s205 = scalar_select %p204, %s25, 0
          %s206 = smul.addr %s205, 4
          %s207 = scalar_lea.vmem %s1, %s206
        $region16: #{tpu_custom_call.1} parent=11 // pred_fallthru
          _
        // Predicated region
        $region17: #{tpu_custom_call.1} parent=11 // pred_check
          %p208 = pneg %p111
        $region18: #{tpu_custom_call.1} parent=11 // pred_check_branch
          %210 = sbr.rel (%p208) target = $region20
        $region19: #{tpu_custom_call.1} parent=11 // pred_region
          %p211 = scmp.lt.s32.totalorder %s25, 0
          %s212 = scalar_select %p211, %s25, 0
          %s213 = scalar_lea.vmem %s2, %s212
        $region20: #{tpu_custom_call.1} parent=11 // pred_fallthru
          _
        // Predicated region
        $region21: #{tpu_custom_call.1} parent=11 // pred_check
          %p214 = pneg %p137
        $region22: #{tpu_custom_call.1} parent=11 // pred_check_branch
          %216 = sbr.rel (%p214) target = $region24
        $region23: #{tpu_custom_call.1} parent=11 // pred_region
          %p217 = scmp.lt.s32.totalorder %s26, 0
          %s218 = scalar_select %p217, %s26, 0
          %s219 = smul.addr %s218, 2
          %s220 = smul.addr %s219, 4
          %s221 = scalar_lea.vmem %s3, %s220
        $region24: #{tpu_custom_call.1} parent=11 // pred_fallthru
          _
        // Predicated region
        $region25: #{tpu_custom_call.1} parent=11 // pred_check
          %p222 = pneg %p158
        $region26: #{tpu_custom_call.1} parent=11 // pred_check_branch
          %224 = sbr.rel (%p222) target = $region28
        $region27: #{tpu_custom_call.1} parent=11 // pred_region
          _
        $region28: #{tpu_custom_call.1} parent=11 // pred_fallthru
          _
      $region12: #{tpu_custom_call.1} parent=5 // pred_fallthru
        _
      %p225 = scmp.lt.s32.totalorder %s14, 2
      // Predicated region
      $region29: #{tpu_custom_call.1} parent=5 // pred_check
        %p226 = pneg %p225
      $region30: #{tpu_custom_call.1} parent=5 // pred_check_branch
        %228 = sbr.rel (%p226) target = $region32
      $region31: #{tpu_custom_call.1} parent=5 // pred_region
        // Predicated region
        $region33: #{tpu_custom_call.1} parent=31 // pred_check
          %p229 = pneg %p53
        $region34: #{tpu_custom_call.1} parent=31 // pred_check_branch
          %231 = sbr.rel (%p229) target = $region36
        $region35: #{tpu_custom_call.1} parent=31 // pred_region
          %p232 = scmp.lt.s32.totalorder %s21, 1
          %s233 = scalar_select %p232, %s21, 1
          %s234 = smul.addr %s233, 54
          %s235 = smul.addr %s234, 4
          %s236 = scalar_lea.vmem %s0, %s235
        $region36: #{tpu_custom_call.1} parent=31 // pred_fallthru
          _
      $region32: #{tpu_custom_call.1} parent=5 // pred_fallthru
        _
      %p237 = scmp.le.s32.totalorder 1, %s14
      %p238 = scmp.lt.s32.totalorder %s14, 3
      %p239 = pnand %p237, %p238
      %p240 = pneg %p239
      // Predicated region
      $region37: #{tpu_custom_call.1} parent=5 // pred_check
        _
      $region38: #{tpu_custom_call.1} parent=5 // pred_check_branch
        %242 = sbr.rel (%p239) target = $region40
      $region39: #{tpu_custom_call.1} parent=5 // pred_region
        %s243 = ssub.s32 %s14, 1
        %p244 = scmp.lt.s32.totalorder %s24, 1
        %s245 = scalar_select %p244, %s24, 1
        %s246 = smul.addr %s245, 54
        %s247 = smul.addr %s246, 4
        %s248 = scalar_lea.vmem %s0, %s247
        %p249 = pneg %p59
        %p250 = pneg %p56
        %p251 = scmp.lt.s32.totalorder %s25, 0
        %s252 = scalar_select %p251, %s25, 0
        %s253 = smul.addr %s252, 4
        %s254 = scalar_lea.vmem %s1, %s253
        %p255 = pneg %p85
        %p256 = pneg %p82
        %p257 = scmp.lt.s32.totalorder %s25, 0
        %s258 = scalar_select %p257, %s25, 0
        %s259 = scalar_lea.vmem %s2, %s258
        %p260 = pneg %p111
        %p261 = pneg %p108
        %p262 = scmp.lt.s32.totalorder %s26, 0
        %s263 = scalar_select %p262, %s26, 0
        %s264 = smul.addr %s263, 2
        %s265 = smul.addr %s264, 4
        %s266 = scalar_lea.vmem %s3, %s265
        %p267 = pneg %p137
        %p268 = pneg %p134
        %p269 = pneg %p158
        %p270 = pneg %p155
        %p271 = pneg %p186
        %p272 = pneg %p183
        %s273 = sand.u32 %s173, 1
        %s274 = scalar_lea.sflag [#allocation4], %s273
        %s275 = sand.u32 %s173, 1
        %s276 = smul.addr %s275, 8
        %s277 = scalar_lea.vmem [#allocation3], %s276
        %p278 = scmp.lt.s32.totalorder %s24, 1
        %s279 = scalar_select %p278, %s24, 1
        %s280 = smul.addr %s279, 54
        %s281 = smul.addr %s280, 4
        %s282 = scalar_lea.vmem %s0, %s281
        %p283 = scmp.lt.s32.totalorder %s25, 0
        %s284 = scalar_select %p283, %s25, 0
        %s285 = smul.addr %s284, 4
        %s286 = scalar_lea.vmem %s1, %s285
        %p287 = scmp.lt.s32.totalorder %s25, 0
        %s288 = scalar_select %p287, %s25, 0
        %s289 = scalar_lea.vmem %s2, %s288
        %p290 = scmp.lt.s32.totalorder %s26, 0
        %s291 = scalar_select %p290, %s26, 0
        %s292 = smul.addr %s291, 2
        %s293 = smul.addr %s292, 4
        %s294 = scalar_lea.vmem %s3, %s293
        %p296 = scmp.eq.s32.totalorder %s26, 0
        // Predicated region
        $region41: #{tpu_custom_call.1} parent=39 // pred_check
          %p297 = pneg %p296
        $region42: #{tpu_custom_call.1} parent=39 // pred_check_branch
          %299 = sbr.rel (%p297) target = $region44
        $region43: #{tpu_custom_call.1} parent=39 // pred_region
          %300 = vst [vmem:[#allocation2] sm:$0xff] 0.0
        $region44: #{tpu_custom_call.1} parent=39 // pred_fallthru
          _
        %s301 = smul.u32 %s26, 16
        %s302 = smul.u32 %s301, 3
        %s303 = smul.addr %s302, 4
        %s304 = scalar_lea.vmem %s282, %s303
        %v305 = vld [vmem:[%s304] sm:$0xf]
        %v306 = vld [vmem:[%s304 + $0x4] sm:$0xf]
        %v307 = vld [vmem:[%s304 + $0x8] sm:$0x1]
        %v308 = vld [vmem:[%s304 + $0xc] sm:$0xf]
        %v309 = vld [vmem:[%s304 + $0x10] sm:$0xf]
        %v310 = vld [vmem:[%s304 + $0x14] sm:$0x1]
        %v311 = vld [vmem:[%s304 + $0x18] sm:$0xf]
        %v312 = vld [vmem:[%s304 + $0x1c] sm:$0xf]
        %v313 = vld [vmem:[%s304 + $0x20] sm:$0x1]
        %v314 = vld [vmem:[%s304 + $0x24] sm:$0xf]
        %v315 = vld [vmem:[%s304 + $0x28] sm:$0xf]
        %v316 = vld [vmem:[%s304 + $0x2c] sm:$0x1]
        %v317 = vld [vmem:[%s304 + $0x30] sm:$0xf]
        %v318 = vld [vmem:[%s304 + $0x34] sm:$0xf]
        %v319 = vld [vmem:[%s304 + $0x38] sm:$0x1]
        %v320 = vld [vmem:[%s304 + $0x3c] sm:$0xf]
        %v321 = vld [vmem:[%s304 + $0x40] sm:$0xf]
        %v322 = vld [vmem:[%s304 + $0x44] sm:$0x1]
        %v323 = vld [vmem:[%s304 + $0x48] sm:$0xf]
        %v324 = vld [vmem:[%s304 + $0x4c] sm:$0xf]
        %v325 = vld [vmem:[%s304 + $0x50] sm:$0x1]
        %v326 = vld [vmem:[%s304 + $0x54] sm:$0xf]
        %v327 = vld [vmem:[%s304 + $0x58] sm:$0xf]
        %v328 = vld [vmem:[%s304 + $0x5c] sm:$0x1]
        %v329 = vld [vmem:[%s304 + $0x60] sm:$0xf]
        %v330 = vld [vmem:[%s304 + $0x64] sm:$0xf]
        %v331 = vld [vmem:[%s304 + $0x68] sm:$0x1]
        %v332 = vld [vmem:[%s304 + $0x6c] sm:$0xf]
        %v333 = vld [vmem:[%s304 + $0x70] sm:$0xf]
        %v334 = vld [vmem:[%s304 + $0x74] sm:$0x1]
        %v335 = vld [vmem:[%s304 + $0x78] sm:$0xf]
        %v336 = vld [vmem:[%s304 + $0x7c] sm:$0xf]
        %v337 = vld [vmem:[%s304 + $0x80] sm:$0x1]
        %v338 = vld [vmem:[%s304 + $0x84] sm:$0xf]
        %v339 = vld [vmem:[%s304 + $0x88] sm:$0xf]
        %v340 = vld [vmem:[%s304 + $0x8c] sm:$0x1]
        %v341 = vld [vmem:[%s304 + $0x90] sm:$0xf]
        %v342 = vld [vmem:[%s304 + $0x94] sm:$0xf]
        %v343 = vld [vmem:[%s304 + $0x98] sm:$0x1]
        %v344 = vld [vmem:[%s304 + $0x9c] sm:$0xf]
        %v345 = vld [vmem:[%s304 + $0xa0] sm:$0xf]
        %v346 = vld [vmem:[%s304 + $0xa4] sm:$0x1]
        %v347 = vld [vmem:[%s304 + $0xa8] sm:$0xf]
        %v348 = vld [vmem:[%s304 + $0xac] sm:$0xf]
        %v349 = vld [vmem:[%s304 + $0xb0] sm:$0x1]
        %v350 = vld [vmem:[%s304 + $0xb4] sm:$0xf]
        %v351 = vld [vmem:[%s304 + $0xb8] sm:$0xf]
        %v352 = vld [vmem:[%s304 + $0xbc] sm:$0x1]
        %v353 = vld [vmem:[%s304 + $0xc0] sm:$0xf]
        %v354 = vld [vmem:[%s304 + $0xc4] sm:$0xf]
        %v355 = vld [vmem:[%s304 + $0xc8] sm:$0x1]
        %v356 = vld [vmem:[%s304 + $0xcc] sm:$0xf]
        %v357 = vld [vmem:[%s304 + $0xd0] sm:$0xf]
        %v358 = vld [vmem:[%s304 + $0xd4] sm:$0x1]
        %vm359 = vsmask.f32 3328
        %vm360 = vsmask.f32 7440
        %vm361 = vmor %vm359, %vm360
        %v363 = vshrl.u32 %v305, 16
        %v365 = vrot.slane %v363, 4
        %v366 = vshll.u32 %v305, 16
        %v368 = vrot.slane %v366, 5
        %v369 = vor.u32 %v365, %v368
        %v370 = vrot.slane %v369, 4
        %v372 = vshll.u32 %v306, 16
        %v374 = vrot.slane %v372, 5
        %v375 = vsel %vm361, %v370, %v374
        %v376 = vshrl.u32 %v306, 16
        %v378 = vrot.slane %v376, 4
        %v379 = vor.u32 %v378, %v374
        %v380 = vrot.slane %v379, 4
        %v382 = vshll.u32 %v307, 16
        %v384 = vrot.slane %v382, 5
        %v385 = vsel %vm361, %v380, %v384
        %v387 = vshrl.u32 %v308, 16
        %v389 = vrot.slane %v387, 4
        %v390 = vshll.u32 %v308, 16
        %v392 = vrot.slane %v390, 5
        %v393 = vor.u32 %v389, %v392
        %v394 = vrot.slane %v393, 4
        %v396 = vshll.u32 %v309, 16
        %v398 = vrot.slane %v396, 5
        %v399 = vsel %vm361, %v394, %v398
        %v400 = vshrl.u32 %v309, 16
        %v402 = vrot.slane %v400, 4
        %v403 = vor.u32 %v402, %v398
        %v404 = vrot.slane %v403, 4
        %v406 = vshll.u32 %v310, 16
        %v408 = vrot.slane %v406, 5
        %v409 = vsel %vm361, %v404, %v408
        %v411 = vshrl.u32 %v311, 16
        %v413 = vrot.slane %v411, 4
        %v414 = vshll.u32 %v311, 16
        %v416 = vrot.slane %v414, 5
        %v417 = vor.u32 %v413, %v416
        %v418 = vrot.slane %v417, 4
        %v420 = vshll.u32 %v312, 16
        %v422 = vrot.slane %v420, 5
        %v423 = vsel %vm361, %v418, %v422
        %v424 = vshrl.u32 %v312, 16
        %v426 = vrot.slane %v424, 4
        %v427 = vor.u32 %v426, %v422
        %v428 = vrot.slane %v427, 4
        %v430 = vshll.u32 %v313, 16
        %v432 = vrot.slane %v430, 5
        %v433 = vsel %vm361, %v428, %v432
        %v435 = vshrl.u32 %v314, 16
        %v437 = vrot.slane %v435, 4
        %v438 = vshll.u32 %v314, 16
        %v440 = vrot.slane %v438, 5
        %v441 = vor.u32 %v437, %v440
        %v442 = vrot.slane %v441, 4
        %v444 = vshll.u32 %v315, 16
        %v446 = vrot.slane %v444, 5
        %v447 = vsel %vm361, %v442, %v446
        %v448 = vshrl.u32 %v315, 16
        %v450 = vrot.slane %v448, 4
        %v451 = vor.u32 %v450, %v446
        %v452 = vrot.slane %v451, 4
        %v454 = vshll.u32 %v316, 16
        %v456 = vrot.slane %v454, 5
        %v457 = vsel %vm361, %v452, %v456
        %v459 = vshrl.u32 %v317, 16
        %v461 = vrot.slane %v459, 4
        %v462 = vshll.u32 %v317, 16
        %v464 = vrot.slane %v462, 5
        %v465 = vor.u32 %v461, %v464
        %v466 = vrot.slane %v465, 4
        %v468 = vshll.u32 %v318, 16
        %v470 = vrot.slane %v468, 5
        %v471 = vsel %vm361, %v466, %v470
        %v472 = vshrl.u32 %v318, 16
        %v474 = vrot.slane %v472, 4
        %v475 = vor.u32 %v474, %v470
        %v476 = vrot.slane %v475, 4
        %v478 = vshll.u32 %v319, 16
        %v480 = vrot.slane %v478, 5
        %v481 = vsel %vm361, %v476, %v480
        %v483 = vshrl.u32 %v320, 16
        %v485 = vrot.slane %v483, 4
        %v486 = vshll.u32 %v320, 16
        %v488 = vrot.slane %v486, 5
        %v489 = vor.u32 %v485, %v488
        %v490 = vrot.slane %v489, 4
        %v492 = vshll.u32 %v321, 16
        %v494 = vrot.slane %v492, 5
        %v495 = vsel %vm361, %v490, %v494
        %v496 = vshrl.u32 %v321, 16
        %v498 = vrot.slane %v496, 4
        %v499 = vor.u32 %v498, %v494
        %v500 = vrot.slane %v499, 4
        %v502 = vshll.u32 %v322, 16
        %v504 = vrot.slane %v502, 5
        %v505 = vsel %vm361, %v500, %v504
        %v507 = vshrl.u32 %v323, 16
        %v509 = vrot.slane %v507, 4
        %v510 = vshll.u32 %v323, 16
        %v512 = vrot.slane %v510, 5
        %v513 = vor.u32 %v509, %v512
        %v514 = vrot.slane %v513, 4
        %v516 = vshll.u32 %v324, 16
        %v518 = vrot.slane %v516, 5
        %v519 = vsel %vm361, %v514, %v518
        %v520 = vshrl.u32 %v324, 16
        %v522 = vrot.slane %v520, 4
        %v523 = vor.u32 %v522, %v518
        %v524 = vrot.slane %v523, 4
        %v526 = vshll.u32 %v325, 16
        %v528 = vrot.slane %v526, 5
        %v529 = vsel %vm361, %v524, %v528
        %v531 = vshrl.u32 %v326, 16
        %v533 = vrot.slane %v531, 4
        %v534 = vshll.u32 %v326, 16
        %v536 = vrot.slane %v534, 5
        %v537 = vor.u32 %v533, %v536
        %v538 = vrot.slane %v537, 4
        %v540 = vshll.u32 %v327, 16
        %v542 = vrot.slane %v540, 5
        %v543 = vsel %vm361, %v538, %v542
        %v544 = vshrl.u32 %v327, 16
        %v546 = vrot.slane %v544, 4
        %v547 = vor.u32 %v546, %v542
        %v548 = vrot.slane %v547, 4
        %v550 = vshll.u32 %v328, 16
        %v552 = vrot.slane %v550, 5
        %v553 = vsel %vm361, %v548, %v552
        %v555 = vshrl.u32 %v329, 16
        %v557 = vrot.slane %v555, 4
        %v558 = vshll.u32 %v329, 16
        %v560 = vrot.slane %v558, 5
        %v561 = vor.u32 %v557, %v560
        %v562 = vrot.slane %v561, 4
        %v564 = vshll.u32 %v330, 16
        %v566 = vrot.slane %v564, 5
        %v567 = vsel %vm361, %v562, %v566
        %v568 = vshrl.u32 %v330, 16
        %v570 = vrot.slane %v568, 4
        %v571 = vor.u32 %v570, %v566
        %v572 = vrot.slane %v571, 4
        %v574 = vshll.u32 %v331, 16
        %v576 = vrot.slane %v574, 5
        %v577 = vsel %vm361, %v572, %v576
        %v579 = vshrl.u32 %v332, 16
        %v581 = vrot.slane %v579, 4
        %v582 = vshll.u32 %v332, 16
        %v584 = vrot.slane %v582, 5
        %v585 = vor.u32 %v581, %v584
        %v586 = vrot.slane %v585, 4
        %v588 = vshll.u32 %v333, 16
        %v590 = vrot.slane %v588, 5
        %v591 = vsel %vm361, %v586, %v590
        %v592 = vshrl.u32 %v333, 16
        %v594 = vrot.slane %v592, 4
        %v595 = vor.u32 %v594, %v590
        %v596 = vrot.slane %v595, 4
        %v598 = vshll.u32 %v334, 16
        %v600 = vrot.slane %v598, 5
        %v601 = vsel %vm361, %v596, %v600
        %v603 = vshrl.u32 %v335, 16
        %v605 = vrot.slane %v603, 4
        %v606 = vshll.u32 %v335, 16
        %v608 = vrot.slane %v606, 5
        %v609 = vor.u32 %v605, %v608
        %v610 = vrot.slane %v609, 4
        %v612 = vshll.u32 %v336, 16
        %v614 = vrot.slane %v612, 5
        %v615 = vsel %vm361, %v610, %v614
        %v616 = vshrl.u32 %v336, 16
        %v618 = vrot.slane %v616, 4
        %v619 = vor.u32 %v618, %v614
        %v620 = vrot.slane %v619, 4
        %v622 = vshll.u32 %v337, 16
        %v624 = vrot.slane %v622, 5
        %v625 = vsel %vm361, %v620, %v624
        %v627 = vshrl.u32 %v338, 16
        %v629 = vrot.slane %v627, 4
        %v630 = vshll.u32 %v338, 16
        %v632 = vrot.slane %v630, 5
        %v633 = vor.u32 %v629, %v632
        %v634 = vrot.slane %v633, 4
        %v636 = vshll.u32 %v339, 16
        %v638 = vrot.slane %v636, 5
        %v639 = vsel %vm361, %v634, %v638
        %v640 = vshrl.u32 %v339, 16
        %v642 = vrot.slane %v640, 4
        %v643 = vor.u32 %v642, %v638
        %v644 = vrot.slane %v643, 4
        %v646 = vshll.u32 %v340, 16
        %v648 = vrot.slane %v646, 5
        %v649 = vsel %vm361, %v644, %v648
        %v651 = vshrl.u32 %v341, 16
        %v653 = vrot.slane %v651, 4
        %v654 = vshll.u32 %v341, 16
        %v656 = vrot.slane %v654, 5
        %v657 = vor.u32 %v653, %v656
        %v658 = vrot.slane %v657, 4
        %v660 = vshll.u32 %v342, 16
        %v662 = vrot.slane %v660, 5
        %v663 = vsel %vm361, %v658, %v662
        %v664 = vshrl.u32 %v342, 16
        %v666 = vrot.slane %v664, 4
        %v667 = vor.u32 %v666, %v662
        %v668 = vrot.slane %v667, 4
        %v670 = vshll.u32 %v343, 16
        %v672 = vrot.slane %v670, 5
        %v673 = vsel %vm361, %v668, %v672
        %v675 = vshrl.u32 %v344, 16
        %v677 = vrot.slane %v675, 4
        %v678 = vshll.u32 %v344, 16
        %v680 = vrot.slane %v678, 5
        %v681 = vor.u32 %v677, %v680
        %v682 = vrot.slane %v681, 4
        %v684 = vshll.u32 %v345, 16
        %v686 = vrot.slane %v684, 5
        %v687 = vsel %vm361, %v682, %v686
        %v688 = vshrl.u32 %v345, 16
        %v690 = vrot.slane %v688, 4
        %v691 = vor.u32 %v690, %v686
        %v692 = vrot.slane %v691, 4
        %v694 = vshll.u32 %v346, 16
        %v696 = vrot.slane %v694, 5
        %v697 = vsel %vm361, %v692, %v696
        %v699 = vshrl.u32 %v347, 16
        %v701 = vrot.slane %v699, 4
        %v702 = vshll.u32 %v347, 16
        %v704 = vrot.slane %v702, 5
        %v705 = vor.u32 %v701, %v704
        %v706 = vrot.slane %v705, 4
        %v708 = vshll.u32 %v348, 16
        %v710 = vrot.slane %v708, 5
        %v711 = vsel %vm361, %v706, %v710
        %v712 = vshrl.u32 %v348, 16
        %v714 = vrot.slane %v712, 4
        %v715 = vor.u32 %v714, %v710
        %v716 = vrot.slane %v715, 4
        %v718 = vshll.u32 %v349, 16
        %v720 = vrot.slane %v718, 5
        %v721 = vsel %vm361, %v716, %v720
        %v723 = vshrl.u32 %v350, 16
        %v725 = vrot.slane %v723, 4
        %v726 = vshll.u32 %v350, 16
        %v728 = vrot.slane %v726, 5
        %v729 = vor.u32 %v725, %v728
        %v730 = vrot.slane %v729, 4
        %v732 = vshll.u32 %v351, 16
        %v734 = vrot.slane %v732, 5
        %v735 = vsel %vm361, %v730, %v734
        %v736 = vshrl.u32 %v351, 16
        %v738 = vrot.slane %v736, 4
        %v739 = vor.u32 %v738, %v734
        %v740 = vrot.slane %v739, 4
        %v742 = vshll.u32 %v352, 16
        %v744 = vrot.slane %v742, 5
        %v745 = vsel %vm361, %v740, %v744
        %vm794 = vcmask 1042432
        %vm795 = vcmask 1046532
        %vm796 = vmor %vm794, %vm795
        %v797 = vrot.slane %v305, 5
        %v798 = vrot.slane %v797, 4
        %v799 = vrot.slane %v306, 5
        %v800 = vsel %vm796, %v798, %v799
        %v801 = vrot.slane %v799, 4
        %v802 = vrot.slane %v307, 5
        %v803 = vsel %vm796, %v801, %v802
        %v804 = vrot.slane %v308, 5
        %v805 = vrot.slane %v804, 4
        %v806 = vrot.slane %v309, 5
        %v807 = vsel %vm796, %v805, %v806
        %v808 = vrot.slane %v806, 4
        %v809 = vrot.slane %v310, 5
        %v810 = vsel %vm796, %v808, %v809
        %v811 = vrot.slane %v311, 5
        %v812 = vrot.slane %v811, 4
        %v813 = vrot.slane %v312, 5
        %v814 = vsel %vm796, %v812, %v813
        %v815 = vrot.slane %v813, 4
        %v816 = vrot.slane %v313, 5
        %v817 = vsel %vm796, %v815, %v816
        %v818 = vrot.slane %v314, 5
        %v819 = vrot.slane %v818, 4
        %v820 = vrot.slane %v315, 5
        %v821 = vsel %vm796, %v819, %v820
        %v822 = vrot.slane %v820, 4
        %v823 = vrot.slane %v316, 5
        %v824 = vsel %vm796, %v822, %v823
        %v825 = vrot.slane %v317, 5
        %v826 = vrot.slane %v825, 4
        %v827 = vrot.slane %v318, 5
        %v828 = vsel %vm796, %v826, %v827
        %v829 = vrot.slane %v827, 4
        %v830 = vrot.slane %v319, 5
        %v831 = vsel %vm796, %v829, %v830
        %v832 = vrot.slane %v320, 5
        %v833 = vrot.slane %v832, 4
        %v834 = vrot.slane %v321, 5
        %v835 = vsel %vm796, %v833, %v834
        %v836 = vrot.slane %v834, 4
        %v837 = vrot.slane %v322, 5
        %v838 = vsel %vm796, %v836, %v837
        %v839 = vrot.slane %v323, 5
        %v840 = vrot.slane %v839, 4
        %v841 = vrot.slane %v324, 5
        %v842 = vsel %vm796, %v840, %v841
        %v843 = vrot.slane %v841, 4
        %v844 = vrot.slane %v325, 5
        %v845 = vsel %vm796, %v843, %v844
        %v846 = vrot.slane %v326, 5
        %v847 = vrot.slane %v846, 4
        %v848 = vrot.slane %v327, 5
        %v849 = vsel %vm796, %v847, %v848
        %v850 = vrot.slane %v848, 4
        %v851 = vrot.slane %v328, 5
        %v852 = vsel %vm796, %v850, %v851
        %v853 = vrot.slane %v329, 5
        %v854 = vrot.slane %v853, 4
        %v855 = vrot.slane %v330, 5
        %v856 = vsel %vm796, %v854, %v855
        %v857 = vrot.slane %v855, 4
        %v858 = vrot.slane %v331, 5
        %v859 = vsel %vm796, %v857, %v858
        %v860 = vrot.slane %v332, 5
        %v861 = vrot.slane %v860, 4
        %v862 = vrot.slane %v333, 5
        %v863 = vsel %vm796, %v861, %v862
        %v864 = vrot.slane %v862, 4
        %v865 = vrot.slane %v334, 5
        %v866 = vsel %vm796, %v864, %v865
        %v867 = vrot.slane %v335, 5
        %v868 = vrot.slane %v867, 4
        %v869 = vrot.slane %v336, 5
        %v870 = vsel %vm796, %v868, %v869
        %v871 = vrot.slane %v869, 4
        %v872 = vrot.slane %v337, 5
        %v873 = vsel %vm796, %v871, %v872
        %v874 = vrot.slane %v338, 5
        %v875 = vrot.slane %v874, 4
        %v876 = vrot.slane %v339, 5
        %v877 = vsel %vm796, %v875, %v876
        %v878 = vrot.slane %v876, 4
        %v879 = vrot.slane %v340, 5
        %v880 = vsel %vm796, %v878, %v879
        %v881 = vrot.slane %v341, 5
        %v882 = vrot.slane %v881, 4
        %v883 = vrot.slane %v342, 5
        %v884 = vsel %vm796, %v882, %v883
        %v885 = vrot.slane %v883, 4
        %v886 = vrot.slane %v343, 5
        %v887 = vsel %vm796, %v885, %v886
        %v888 = vrot.slane %v344, 5
        %v889 = vrot.slane %v888, 4
        %v890 = vrot.slane %v345, 5
        %v891 = vsel %vm796, %v889, %v890
        %v892 = vrot.slane %v890, 4
        %v893 = vrot.slane %v346, 5
        %v894 = vsel %vm796, %v892, %v893
        %v895 = vrot.slane %v347, 5
        %v896 = vrot.slane %v895, 4
        %v897 = vrot.slane %v348, 5
        %v898 = vsel %vm796, %v896, %v897
        %v899 = vrot.slane %v897, 4
        %v900 = vrot.slane %v349, 5
        %v901 = vsel %vm796, %v899, %v900
        %v902 = vrot.slane %v350, 5
        %v903 = vrot.slane %v902, 4
        %v904 = vrot.slane %v351, 5
        %v905 = vsel %vm796, %v903, %v904
        %v906 = vrot.slane %v904, 4
        %v907 = vrot.slane %v352, 5
        %v908 = vsel %vm796, %v906, %v907
        %v910 = vshrl.u32 %v353, 16
        %v912 = vrot.slane %v910, 4
        %v913 = vshll.u32 %v353, 16
        %v915 = vrot.slane %v913, 5
        %v916 = vor.u32 %v912, %v915
        %v917 = vrot.slane %v916, 4
        %v919 = vshll.u32 %v354, 16
        %v921 = vrot.slane %v919, 5
        %v922 = vsel %vm361, %v917, %v921
        %v923 = vshrl.u32 %v354, 16
        %v925 = vrot.slane %v923, 4
        %v926 = vor.u32 %v925, %v921
        %v927 = vrot.slane %v926, 4
        %v929 = vshll.u32 %v355, 16
        %v931 = vrot.slane %v929, 5
        %v932 = vsel %vm361, %v927, %v931
        %v936 = vrot.slane %v353, 5
        %v937 = vrot.slane %v936, 4
        %v938 = vrot.slane %v354, 5
        %v939 = vsel %vm796, %v937, %v938
        %v940 = vrot.slane %v938, 4
        %v941 = vrot.slane %v355, 5
        %v942 = vsel %vm796, %v940, %v941
        %v944 = vshrl.u32 %v356, 16
        %v946 = vrot.slane %v944, 4
        %v947 = vshll.u32 %v356, 16
        %v949 = vrot.slane %v947, 5
        %v950 = vor.u32 %v946, %v949
        %v951 = vrot.slane %v950, 4
        %v953 = vshll.u32 %v357, 16
        %v955 = vrot.slane %v953, 5
        %v956 = vsel %vm361, %v951, %v955
        %v957 = vshrl.u32 %v357, 16
        %v959 = vrot.slane %v957, 4
        %v960 = vor.u32 %v959, %v955
        %v961 = vrot.slane %v960, 4
        %v963 = vshll.u32 %v358, 16
        %v965 = vrot.slane %v963, 5
        %v966 = vsel %vm361, %v961, %v965
        %v970 = vrot.slane %v356, 5
        %v971 = vrot.slane %v970, 4
        %v972 = vrot.slane %v357, 5
        %v973 = vsel %vm796, %v971, %v972
        %v974 = vrot.slane %v972, 4
        %v975 = vrot.slane %v358, 5
        %v976 = vsel %vm796, %v974, %v975
        %v977 = vunpack.c.l.b16 %v305
        %v978 = vunpack.c.l.b16 %v306
        %v979 = vunpack.c.l.b16 %v308
        %v980 = vunpack.c.l.b16 %v309
        %v981 = vunpack.c.l.b16 %v311
        %v982 = vunpack.c.l.b16 %v312
        %v983 = vunpack.c.l.b16 %v314
        %v984 = vunpack.c.l.b16 %v315
        %v985 = vunpack.c.l.b16 %v317
        %v986 = vunpack.c.l.b16 %v318
        %v987 = vunpack.c.l.b16 %v320
        %v988 = vunpack.c.l.b16 %v321
        %v989 = vunpack.c.l.b16 %v323
        %v990 = vunpack.c.l.b16 %v324
        %v991 = vunpack.c.l.b16 %v326
        %v992 = vunpack.c.l.b16 %v327
        %v993 = vunpack.c.l.b16 %v329
        %v994 = vunpack.c.l.b16 %v330
        %v995 = vunpack.c.l.b16 %v332
        %v996 = vunpack.c.l.b16 %v333
        %v997 = vunpack.c.l.b16 %v335
        %v998 = vunpack.c.l.b16 %v336
        %v999 = vunpack.c.l.b16 %v338
        %v1000 = vunpack.c.l.b16 %v339
        %v1001 = vunpack.c.l.b16 %v341
        %v1002 = vunpack.c.l.b16 %v342
        %v1003 = vunpack.c.l.b16 %v344
        %v1004 = vunpack.c.l.b16 %v345
        %v1005 = vunpack.c.l.b16 %v347
        %v1006 = vunpack.c.l.b16 %v348
        %v1007 = vunpack.c.l.b16 %v350
        %v1008 = vunpack.c.l.b16 %v351
        %v1009 = vpack.c.b16 %v978, %v977
        %v1010 = vpack.c.b16 %v980, %v979
        %v1011 = vpack.c.b16 %v982, %v981
        %v1012 = vpack.c.b16 %v984, %v983
        %v1013 = vpack.c.b16 %v986, %v985
        %v1014 = vpack.c.b16 %v988, %v987
        %v1015 = vpack.c.b16 %v990, %v989
        %v1016 = vpack.c.b16 %v992, %v991
        %v1017 = vpack.c.b16 %v994, %v993
        %v1018 = vpack.c.b16 %v996, %v995
        %v1019 = vpack.c.b16 %v998, %v997
        %v1020 = vpack.c.b16 %v1000, %v999
        %v1021 = vpack.c.b16 %v1002, %v1001
        %v1022 = vpack.c.b16 %v1004, %v1003
        %v1023 = vpack.c.b16 %v1006, %v1005
        %v1024 = vpack.c.b16 %v1008, %v1007
        %v1025 = vunpack.c.l.b16 %v375
        %v1026 = vunpack.c.l.b16 %v385
        %v1027 = vunpack.c.l.b16 %v399
        %v1028 = vunpack.c.l.b16 %v409
        %v1029 = vunpack.c.l.b16 %v423
        %v1030 = vunpack.c.l.b16 %v433
        %v1031 = vunpack.c.l.b16 %v447
        %v1032 = vunpack.c.l.b16 %v457
        %v1033 = vunpack.c.l.b16 %v471
        %v1034 = vunpack.c.l.b16 %v481
        %v1035 = vunpack.c.l.b16 %v495
        %v1036 = vunpack.c.l.b16 %v505
        %v1037 = vunpack.c.l.b16 %v519
        %v1038 = vunpack.c.l.b16 %v529
        %v1039 = vunpack.c.l.b16 %v543
        %v1040 = vunpack.c.l.b16 %v553
        %v1041 = vunpack.c.l.b16 %v567
        %v1042 = vunpack.c.l.b16 %v577
        %v1043 = vunpack.c.l.b16 %v591
        %v1044 = vunpack.c.l.b16 %v601
        %v1045 = vunpack.c.l.b16 %v615
        %v1046 = vunpack.c.l.b16 %v625
        %v1047 = vunpack.c.l.b16 %v639
        %v1048 = vunpack.c.l.b16 %v649
        %v1049 = vunpack.c.l.b16 %v663
        %v1050 = vunpack.c.l.b16 %v673
        %v1051 = vunpack.c.l.b16 %v687
        %v1052 = vunpack.c.l.b16 %v697
        %v1053 = vunpack.c.l.b16 %v711
        %v1054 = vunpack.c.l.b16 %v721
        %v1055 = vunpack.c.l.b16 %v735
        %v1056 = vunpack.c.l.b16 %v745
        %v1057 = vpack.c.b16 %v1026, %v1025
        %v1058 = vpack.c.b16 %v1028, %v1027
        %v1059 = vpack.c.b16 %v1030, %v1029
        %v1060 = vpack.c.b16 %v1032, %v1031
        %v1061 = vpack.c.b16 %v1034, %v1033
        %v1062 = vpack.c.b16 %v1036, %v1035
        %v1063 = vpack.c.b16 %v1038, %v1037
        %v1064 = vpack.c.b16 %v1040, %v1039
        %v1065 = vpack.c.b16 %v1042, %v1041
        %v1066 = vpack.c.b16 %v1044, %v1043
        %v1067 = vpack.c.b16 %v1046, %v1045
        %v1068 = vpack.c.b16 %v1048, %v1047
        %v1069 = vpack.c.b16 %v1050, %v1049
        %v1070 = vpack.c.b16 %v1052, %v1051
        %v1071 = vpack.c.b16 %v1054, %v1053
        %v1072 = vpack.c.b16 %v1056, %v1055
        %1073 = vrot.lane.b32.xlu0 %v1057, 8
        %v1074 = vpop.permute.xlu0 %1073
        %1075 = vrot.lane.b32.xlu0 %v1058, 8
        %v1076 = vpop.permute.xlu0 %1075
        %1077 = vrot.lane.b32.xlu0 %v1059, 8
        %v1078 = vpop.permute.xlu0 %1077
        %1079 = vrot.lane.b32.xlu0 %v1060, 8
        %v1080 = vpop.permute.xlu0 %1079
        %1081 = vrot.lane.b32.xlu0 %v1061, 8
        %v1082 = vpop.permute.xlu0 %1081
        %1083 = vrot.lane.b32.xlu0 %v1062, 8
        %v1084 = vpop.permute.xlu0 %1083
        %1085 = vrot.lane.b32.xlu0 %v1063, 8
        %v1086 = vpop.permute.xlu0 %1085
        %1087 = vrot.lane.b32.xlu0 %v1064, 8
        %v1088 = vpop.permute.xlu0 %1087
        %1089 = vrot.lane.b32.xlu0 %v1065, 8
        %v1090 = vpop.permute.xlu0 %1089
        %1091 = vrot.lane.b32.xlu0 %v1066, 8
        %v1092 = vpop.permute.xlu0 %1091
        %1093 = vrot.lane.b32.xlu0 %v1067, 8
        %v1094 = vpop.permute.xlu0 %1093
        %1095 = vrot.lane.b32.xlu0 %v1068, 8
        %v1096 = vpop.permute.xlu0 %1095
        %1097 = vrot.lane.b32.xlu0 %v1069, 8
        %v1098 = vpop.permute.xlu0 %1097
        %1099 = vrot.lane.b32.xlu0 %v1070, 8
        %v1100 = vpop.permute.xlu0 %1099
        %1101 = vrot.lane.b32.xlu0 %v1071, 8
        %v1102 = vpop.permute.xlu0 %1101
        %1103 = vrot.lane.b32.xlu0 %v1072, 8
        %v1104 = vpop.permute.xlu0 %1103
        %v1105 = vunpack.c.l.b16 %v800
        %v1106 = vunpack.c.l.b16 %v803
        %v1107 = vunpack.c.l.b16 %v807
        %v1108 = vunpack.c.l.b16 %v810
        %v1109 = vunpack.c.l.b16 %v814
        %v1110 = vunpack.c.l.b16 %v817
        %v1111 = vunpack.c.l.b16 %v821
        %v1112 = vunpack.c.l.b16 %v824
        %v1113 = vunpack.c.l.b16 %v828
        %v1114 = vunpack.c.l.b16 %v831
        %v1115 = vunpack.c.l.b16 %v835
        %v1116 = vunpack.c.l.b16 %v838
        %v1117 = vunpack.c.l.b16 %v842
        %v1118 = vunpack.c.l.b16 %v845
        %v1119 = vunpack.c.l.b16 %v849
        %v1120 = vunpack.c.l.b16 %v852
        %v1121 = vunpack.c.l.b16 %v856
        %v1122 = vunpack.c.l.b16 %v859
        %v1123 = vunpack.c.l.b16 %v863
        %v1124 = vunpack.c.l.b16 %v866
        %v1125 = vunpack.c.l.b16 %v870
        %v1126 = vunpack.c.l.b16 %v873
        %v1127 = vunpack.c.l.b16 %v877
        %v1128 = vunpack.c.l.b16 %v880
        %v1129 = vunpack.c.l.b16 %v884
        %v1130 = vunpack.c.l.b16 %v887
        %v1131 = vunpack.c.l.b16 %v891
        %v1132 = vunpack.c.l.b16 %v894
        %v1133 = vunpack.c.l.b16 %v898
        %v1134 = vunpack.c.l.b16 %v901
        %v1135 = vunpack.c.l.b16 %v905
        %v1136 = vunpack.c.l.b16 %v908
        %v1137 = vpack.c.b16 %v1106, %v1105
        %v1138 = vpack.c.b16 %v1108, %v1107
        %v1139 = vpack.c.b16 %v1110, %v1109
        %v1140 = vpack.c.b16 %v1112, %v1111
        %v1141 = vpack.c.b16 %v1114, %v1113
        %v1142 = vpack.c.b16 %v1116, %v1115
        %v1143 = vpack.c.b16 %v1118, %v1117
        %v1144 = vpack.c.b16 %v1120, %v1119
        %v1145 = vpack.c.b16 %v1122, %v1121
        %v1146 = vpack.c.b16 %v1124, %v1123
        %v1147 = vpack.c.b16 %v1126, %v1125
        %v1148 = vpack.c.b16 %v1128, %v1127
        %v1149 = vpack.c.b16 %v1130, %v1129
        %v1150 = vpack.c.b16 %v1132, %v1131
        %v1151 = vpack.c.b16 %v1134, %v1133
        %v1152 = vpack.c.b16 %v1136, %v1135
        %1153 = vrot.lane.b32.xlu0 %v1137, 16
        %v1154 = vpop.permute.xlu0 %1153
        %1155 = vrot.lane.b32.xlu0 %v1138, 16
        %v1156 = vpop.permute.xlu0 %1155
        %1157 = vrot.lane.b32.xlu0 %v1139, 16
        %v1158 = vpop.permute.xlu0 %1157
        %1159 = vrot.lane.b32.xlu0 %v1140, 16
        %v1160 = vpop.permute.xlu0 %1159
        %1161 = vrot.lane.b32.xlu0 %v1141, 16
        %v1162 = vpop.permute.xlu0 %1161
        %1163 = vrot.lane.b32.xlu0 %v1142, 16
        %v1164 = vpop.permute.xlu0 %1163
        %1165 = vrot.lane.b32.xlu0 %v1143, 16
        %v1166 = vpop.permute.xlu0 %1165
        %1167 = vrot.lane.b32.xlu0 %v1144, 16
        %v1168 = vpop.permute.xlu0 %1167
        %1169 = vrot.lane.b32.xlu0 %v1145, 16
        %v1170 = vpop.permute.xlu0 %1169
        %1171 = vrot.lane.b32.xlu0 %v1146, 16
        %v1172 = vpop.permute.xlu0 %1171
        %1173 = vrot.lane.b32.xlu0 %v1147, 16
        %v1174 = vpop.permute.xlu0 %1173
        %1175 = vrot.lane.b32.xlu0 %v1148, 16
        %v1176 = vpop.permute.xlu0 %1175
        %1177 = vrot.lane.b32.xlu0 %v1149, 16
        %v1178 = vpop.permute.xlu0 %1177
        %1179 = vrot.lane.b32.xlu0 %v1150, 16
        %v1180 = vpop.permute.xlu0 %1179
        %1181 = vrot.lane.b32.xlu0 %v1151, 16
        %v1182 = vpop.permute.xlu0 %1181
        %1183 = vrot.lane.b32.xlu0 %v1152, 16
        %v1184 = vpop.permute.xlu0 %1183
        %v1185 = vunpack.c.l.b16 %v353
        %v1186 = vunpack.c.l.b16 %v354
        %v1187 = vpack.c.b16 %v1186, %v1185
        %1188 = vrot.lane.b32.xlu0 %v1010, 24
        %v1189 = vpop.permute.xlu0 %1188
        %1190 = vrot.lane.b32.xlu0 %v1011, 24
        %v1191 = vpop.permute.xlu0 %1190
        %1192 = vrot.lane.b32.xlu0 %v1012, 24
        %v1193 = vpop.permute.xlu0 %1192
        %1194 = vrot.lane.b32.xlu0 %v1013, 24
        %v1195 = vpop.permute.xlu0 %1194
        %1196 = vrot.lane.b32.xlu0 %v1014, 24
        %v1197 = vpop.permute.xlu0 %1196
        %1198 = vrot.lane.b32.xlu0 %v1015, 24
        %v1199 = vpop.permute.xlu0 %1198
        %1200 = vrot.lane.b32.xlu0 %v1016, 24
        %v1201 = vpop.permute.xlu0 %1200
        %1202 = vrot.lane.b32.xlu0 %v1017, 24
        %v1203 = vpop.permute.xlu0 %1202
        %1204 = vrot.lane.b32.xlu0 %v1018, 24
        %v1205 = vpop.permute.xlu0 %1204
        %1206 = vrot.lane.b32.xlu0 %v1019, 24
        %v1207 = vpop.permute.xlu0 %1206
        %1208 = vrot.lane.b32.xlu0 %v1020, 24
        %v1209 = vpop.permute.xlu0 %1208
        %1210 = vrot.lane.b32.xlu0 %v1021, 24
        %v1211 = vpop.permute.xlu0 %1210
        %1212 = vrot.lane.b32.xlu0 %v1022, 24
        %v1213 = vpop.permute.xlu0 %1212
        %1214 = vrot.lane.b32.xlu0 %v1023, 24
        %v1215 = vpop.permute.xlu0 %1214
        %1216 = vrot.lane.b32.xlu0 %v1024, 24
        %v1217 = vpop.permute.xlu0 %1216
        %1218 = vrot.lane.b32.xlu0 %v1187, 24
        %v1219 = vpop.permute.xlu0 %1218
        %v1220 = vunpack.c.l.b16 %v922
        %v1221 = vunpack.c.l.b16 %v932
        %v1222 = vpack.c.b16 %v1221, %v1220
        %1223 = vrot.lane.b32.xlu0 %v1058, 32
        %v1224 = vpop.permute.xlu0 %1223
        %1225 = vrot.lane.b32.xlu0 %v1059, 32
        %v1226 = vpop.permute.xlu0 %1225
        %1227 = vrot.lane.b32.xlu0 %v1060, 32
        %v1228 = vpop.permute.xlu0 %1227
        %1229 = vrot.lane.b32.xlu0 %v1061, 32
        %v1230 = vpop.permute.xlu0 %1229
        %1231 = vrot.lane.b32.xlu0 %v1062, 32
        %v1232 = vpop.permute.xlu0 %1231
        %1233 = vrot.lane.b32.xlu0 %v1063, 32
        %v1234 = vpop.permute.xlu0 %1233
        %1235 = vrot.lane.b32.xlu0 %v1064, 32
        %v1236 = vpop.permute.xlu0 %1235
        %1237 = vrot.lane.b32.xlu0 %v1065, 32
        %v1238 = vpop.permute.xlu0 %1237
        %1239 = vrot.lane.b32.xlu0 %v1066, 32
        %v1240 = vpop.permute.xlu0 %1239
        %1241 = vrot.lane.b32.xlu0 %v1067, 32
        %v1242 = vpop.permute.xlu0 %1241
        %1243 = vrot.lane.b32.xlu0 %v1068, 32
        %v1244 = vpop.permute.xlu0 %1243
        %1245 = vrot.lane.b32.xlu0 %v1069, 32
        %v1246 = vpop.permute.xlu0 %1245
        %1247 = vrot.lane.b32.xlu0 %v1070, 32
        %v1248 = vpop.permute.xlu0 %1247
        %1249 = vrot.lane.b32.xlu0 %v1071, 32
        %v1250 = vpop.permute.xlu0 %1249
        %1251 = vrot.lane.b32.xlu0 %v1072, 32
        %v1252 = vpop.permute.xlu0 %1251
        %1253 = vrot.lane.b32.xlu0 %v1222, 32
        %v1254 = vpop.permute.xlu0 %1253
        %v1255 = vunpack.c.l.b16 %v939
        %v1256 = vunpack.c.l.b16 %v942
        %v1257 = vpack.c.b16 %v1256, %v1255
        %1258 = vrot.lane.b32.xlu0 %v1138, 40
        %v1259 = vpop.permute.xlu0 %1258
        %1260 = vrot.lane.b32.xlu0 %v1139, 40
        %v1261 = vpop.permute.xlu0 %1260
        %1262 = vrot.lane.b32.xlu0 %v1140, 40
        %v1263 = vpop.permute.xlu0 %1262
        %1264 = vrot.lane.b32.xlu0 %v1141, 40
        %v1265 = vpop.permute.xlu0 %1264
        %1266 = vrot.lane.b32.xlu0 %v1142, 40
        %v1267 = vpop.permute.xlu0 %1266
        %1268 = vrot.lane.b32.xlu0 %v1143, 40
        %v1269 = vpop.permute.xlu0 %1268
        %1270 = vrot.lane.b32.xlu0 %v1144, 40
        %v1271 = vpop.permute.xlu0 %1270
        %1272 = vrot.lane.b32.xlu0 %v1145, 40
        %v1273 = vpop.permute.xlu0 %1272
        %1274 = vrot.lane.b32.xlu0 %v1146, 40
        %v1275 = vpop.permute.xlu0 %1274
        %1276 = vrot.lane.b32.xlu0 %v1147, 40
        %v1277 = vpop.permute.xlu0 %1276
        %1278 = vrot.lane.b32.xlu0 %v1148, 40
        %v1279 = vpop.permute.xlu0 %1278
        %1280 = vrot.lane.b32.xlu0 %v1149, 40
        %v1281 = vpop.permute.xlu0 %1280
        %1282 = vrot.lane.b32.xlu0 %v1150, 40
        %v1283 = vpop.permute.xlu0 %1282
        %1284 = vrot.lane.b32.xlu0 %v1151, 40
        %v1285 = vpop.permute.xlu0 %1284
        %1286 = vrot.lane.b32.xlu0 %v1152, 40
        %v1287 = vpop.permute.xlu0 %1286
        %1288 = vrot.lane.b32.xlu0 %v1257, 40
        %v1289 = vpop.permute.xlu0 %1288
        %v1290 = vunpack.c.l.b16 %v356
        %v1291 = vunpack.c.l.b16 %v357
        %v1292 = vpack.c.b16 %v1291, %v1290
        %1293 = vrot.lane.b32.xlu0 %v1011, 48
        %v1294 = vpop.permute.xlu0 %1293
        %1295 = vrot.lane.b32.xlu0 %v1012, 48
        %v1296 = vpop.permute.xlu0 %1295
        %1297 = vrot.lane.b32.xlu0 %v1013, 48
        %v1298 = vpop.permute.xlu0 %1297
        %1299 = vrot.lane.b32.xlu0 %v1014, 48
        %v1300 = vpop.permute.xlu0 %1299
        %1301 = vrot.lane.b32.xlu0 %v1015, 48
        %v1302 = vpop.permute.xlu0 %1301
        %1303 = vrot.lane.b32.xlu0 %v1016, 48
        %v1304 = vpop.permute.xlu0 %1303
        %1305 = vrot.lane.b32.xlu0 %v1017, 48
        %v1306 = vpop.permute.xlu0 %1305
        %1307 = vrot.lane.b32.xlu0 %v1018, 48
        %v1308 = vpop.permute.xlu0 %1307
        %1309 = vrot.lane.b32.xlu0 %v1019, 48
        %v1310 = vpop.permute.xlu0 %1309
        %1311 = vrot.lane.b32.xlu0 %v1020, 48
        %v1312 = vpop.permute.xlu0 %1311
        %1313 = vrot.lane.b32.xlu0 %v1021, 48
        %v1314 = vpop.permute.xlu0 %1313
        %1315 = vrot.lane.b32.xlu0 %v1022, 48
        %v1316 = vpop.permute.xlu0 %1315
        %1317 = vrot.lane.b32.xlu0 %v1023, 48
        %v1318 = vpop.permute.xlu0 %1317
        %1319 = vrot.lane.b32.xlu0 %v1024, 48
        %v1320 = vpop.permute.xlu0 %1319
        %1321 = vrot.lane.b32.xlu0 %v1187, 48
        %v1322 = vpop.permute.xlu0 %1321
        %1323 = vrot.lane.b32.xlu0 %v1292, 48
        %v1324 = vpop.permute.xlu0 %1323
        %v1325 = vunpack.c.l.b16 %v956
        %v1326 = vunpack.c.l.b16 %v966
        %v1327 = vpack.c.b16 %v1326, %v1325
        %1328 = vrot.lane.b32.xlu0 %v1059, 56
        %v1329 = vpop.permute.xlu0 %1328
        %1330 = vrot.lane.b32.xlu0 %v1060, 56
        %v1331 = vpop.permute.xlu0 %1330
        %1332 = vrot.lane.b32.xlu0 %v1061, 56
        %v1333 = vpop.permute.xlu0 %1332
        %1334 = vrot.lane.b32.xlu0 %v1062, 56
        %v1335 = vpop.permute.xlu0 %1334
        %1336 = vrot.lane.b32.xlu0 %v1063, 56
        %v1337 = vpop.permute.xlu0 %1336
        %1338 = vrot.lane.b32.xlu0 %v1064, 56
        %v1339 = vpop.permute.xlu0 %1338
        %1340 = vrot.lane.b32.xlu0 %v1065, 56
        %v1341 = vpop.permute.xlu0 %1340
        %1342 = vrot.lane.b32.xlu0 %v1066, 56
        %v1343 = vpop.permute.xlu0 %1342
        %1344 = vrot.lane.b32.xlu0 %v1067, 56
        %v1345 = vpop.permute.xlu0 %1344
        %1346 = vrot.lane.b32.xlu0 %v1068, 56
        %v1347 = vpop.permute.xlu0 %1346
        %1348 = vrot.lane.b32.xlu0 %v1069, 56
        %v1349 = vpop.permute.xlu0 %1348
        %1350 = vrot.lane.b32.xlu0 %v1070, 56
        %v1351 = vpop.permute.xlu0 %1350
        %1352 = vrot.lane.b32.xlu0 %v1071, 56
        %v1353 = vpop.permute.xlu0 %1352
        %1354 = vrot.lane.b32.xlu0 %v1072, 56
        %v1355 = vpop.permute.xlu0 %1354
        %1356 = vrot.lane.b32.xlu0 %v1222, 56
        %v1357 = vpop.permute.xlu0 %1356
        %1358 = vrot.lane.b32.xlu0 %v1327, 56
        %v1359 = vpop.permute.xlu0 %1358
        %v1360 = vunpack.c.l.b16 %v973
        %v1361 = vunpack.c.l.b16 %v976
        %v1362 = vpack.c.b16 %v1361, %v1360
        %1363 = vrot.lane.b32.xlu0 %v1139, 64
        %v1364 = vpop.permute.xlu0 %1363
        %1365 = vrot.lane.b32.xlu0 %v1140, 64
        %v1366 = vpop.permute.xlu0 %1365
        %1367 = vrot.lane.b32.xlu0 %v1141, 64
        %v1368 = vpop.permute.xlu0 %1367
        %1369 = vrot.lane.b32.xlu0 %v1142, 64
        %v1370 = vpop.permute.xlu0 %1369
        %1371 = vrot.lane.b32.xlu0 %v1143, 64
        %v1372 = vpop.permute.xlu0 %1371
        %1373 = vrot.lane.b32.xlu0 %v1144, 64
        %v1374 = vpop.permute.xlu0 %1373
        %1375 = vrot.lane.b32.xlu0 %v1145, 64
        %v1376 = vpop.permute.xlu0 %1375
        %1377 = vrot.lane.b32.xlu0 %v1146, 64
        %v1378 = vpop.permute.xlu0 %1377
        %1379 = vrot.lane.b32.xlu0 %v1147, 64
        %v1380 = vpop.permute.xlu0 %1379
        %1381 = vrot.lane.b32.xlu0 %v1148, 64
        %v1382 = vpop.permute.xlu0 %1381
        %1383 = vrot.lane.b32.xlu0 %v1149, 64
        %v1384 = vpop.permute.xlu0 %1383
        %1385 = vrot.lane.b32.xlu0 %v1150, 64
        %v1386 = vpop.permute.xlu0 %1385
        %1387 = vrot.lane.b32.xlu0 %v1151, 64
        %v1388 = vpop.permute.xlu0 %1387
        %1389 = vrot.lane.b32.xlu0 %v1152, 64
        %v1390 = vpop.permute.xlu0 %1389
        %1391 = vrot.lane.b32.xlu0 %v1257, 64
        %v1392 = vpop.permute.xlu0 %1391
        %1393 = vrot.lane.b32.xlu0 %v1362, 64
        %v1394 = vpop.permute.xlu0 %1393
        %vm1395 = vcmask 64512
        %v1398 = vsel %vm1395, %v1009, %v1074
        %v1401 = vsel %vm1395, %v1010, %v1076
        %v1404 = vsel %vm1395, %v1011, %v1078
        %v1407 = vsel %vm1395, %v1012, %v1080
        %v1410 = vsel %vm1395, %v1013, %v1082
        %v1413 = vsel %vm1395, %v1014, %v1084
        %v1416 = vsel %vm1395, %v1015, %v1086
        %v1419 = vsel %vm1395, %v1016, %v1088
        %v1422 = vsel %vm1395, %v1017, %v1090
        %v1425 = vsel %vm1395, %v1018, %v1092
        %v1428 = vsel %vm1395, %v1019, %v1094
        %v1431 = vsel %vm1395, %v1020, %v1096
        %v1434 = vsel %vm1395, %v1021, %v1098
        %v1437 = vsel %vm1395, %v1022, %v1100
        %v1440 = vsel %vm1395, %v1023, %v1102
        %v1443 = vsel %vm1395, %v1024, %v1104
        %vm1444 = vcmask 130048
        %v1446 = vsel %vm1444, %v1398, %v1154
        %v1448 = vsel %vm1444, %v1401, %v1156
        %v1450 = vsel %vm1444, %v1404, %v1158
        %v1452 = vsel %vm1444, %v1407, %v1160
        %v1454 = vsel %vm1444, %v1410, %v1162
        %v1456 = vsel %vm1444, %v1413, %v1164
        %v1458 = vsel %vm1444, %v1416, %v1166
        %v1460 = vsel %vm1444, %v1419, %v1168
        %v1462 = vsel %vm1444, %v1422, %v1170
        %v1464 = vsel %vm1444, %v1425, %v1172
        %v1466 = vsel %vm1444, %v1428, %v1174
        %v1468 = vsel %vm1444, %v1431, %v1176
        %v1470 = vsel %vm1444, %v1434, %v1178
        %v1472 = vsel %vm1444, %v1437, %v1180
        %v1474 = vsel %vm1444, %v1440, %v1182
        %v1476 = vsel %vm1444, %v1443, %v1184
        %vm1477 = vcmask 195584
        %v1479 = vsel %vm1477, %v1446, %v1189
        %v1481 = vsel %vm1477, %v1448, %v1191
        %v1483 = vsel %vm1477, %v1450, %v1193
        %v1485 = vsel %vm1477, %v1452, %v1195
        %v1487 = vsel %vm1477, %v1454, %v1197
        %v1489 = vsel %vm1477, %v1456, %v1199
        %v1491 = vsel %vm1477, %v1458, %v1201
        %v1493 = vsel %vm1477, %v1460, %v1203
        %v1495 = vsel %vm1477, %v1462, %v1205
        %v1497 = vsel %vm1477, %v1464, %v1207
        %v1499 = vsel %vm1477, %v1466, %v1209
        %v1501 = vsel %vm1477, %v1468, %v1211
        %v1503 = vsel %vm1477, %v1470, %v1213
        %v1505 = vsel %vm1477, %v1472, %v1215
        %v1507 = vsel %vm1477, %v1474, %v1217
        %v1509 = vsel %vm1477, %v1476, %v1219
        %vm1510 = vcmask 261120
        %v1512 = vsel %vm1510, %v1479, %v1224
        %v1514 = vsel %vm1510, %v1481, %v1226
        %v1516 = vsel %vm1510, %v1483, %v1228
        %v1518 = vsel %vm1510, %v1485, %v1230
        %v1520 = vsel %vm1510, %v1487, %v1232
        %v1522 = vsel %vm1510, %v1489, %v1234
        %v1524 = vsel %vm1510, %v1491, %v1236
        %v1526 = vsel %vm1510, %v1493, %v1238
        %v1528 = vsel %vm1510, %v1495, %v1240
        %v1530 = vsel %vm1510, %v1497, %v1242
        %v1532 = vsel %vm1510, %v1499, %v1244
        %v1534 = vsel %vm1510, %v1501, %v1246
        %v1536 = vsel %vm1510, %v1503, %v1248
        %v1538 = vsel %vm1510, %v1505, %v1250
        %v1540 = vsel %vm1510, %v1507, %v1252
        %v1542 = vsel %vm1510, %v1509, %v1254
        %vm1543 = vcmask 326656
        %v1545 = vsel %vm1543, %v1512, %v1259
        %v1547 = vsel %vm1543, %v1514, %v1261
        %v1549 = vsel %vm1543, %v1516, %v1263
        %v1551 = vsel %vm1543, %v1518, %v1265
        %v1553 = vsel %vm1543, %v1520, %v1267
        %v1555 = vsel %vm1543, %v1522, %v1269
        %v1557 = vsel %vm1543, %v1524, %v1271
        %v1559 = vsel %vm1543, %v1526, %v1273
        %v1561 = vsel %vm1543, %v1528, %v1275
        %v1563 = vsel %vm1543, %v1530, %v1277
        %v1565 = vsel %vm1543, %v1532, %v1279
        %v1567 = vsel %vm1543, %v1534, %v1281
        %v1569 = vsel %vm1543, %v1536, %v1283
        %v1571 = vsel %vm1543, %v1538, %v1285
        %v1573 = vsel %vm1543, %v1540, %v1287
        %v1575 = vsel %vm1543, %v1542, %v1289
        %vm1576 = vcmask 392192
        %v1578 = vsel %vm1576, %v1545, %v1294
        %v1580 = vsel %vm1576, %v1547, %v1296
        %v1582 = vsel %vm1576, %v1549, %v1298
        %v1584 = vsel %vm1576, %v1551, %v1300
        %v1586 = vsel %vm1576, %v1553, %v1302
        %v1588 = vsel %vm1576, %v1555, %v1304
        %v1590 = vsel %vm1576, %v1557, %v1306
        %v1592 = vsel %vm1576, %v1559, %v1308
        %v1594 = vsel %vm1576, %v1561, %v1310
        %v1596 = vsel %vm1576, %v1563, %v1312
        %v1598 = vsel %vm1576, %v1565, %v1314
        %v1600 = vsel %vm1576, %v1567, %v1316
        %v1602 = vsel %vm1576, %v1569, %v1318
        %v1604 = vsel %vm1576, %v1571, %v1320
        %v1606 = vsel %vm1576, %v1573, %v1322
        %v1608 = vsel %vm1576, %v1575, %v1324
        %vm1609 = vcmask 457728
        %v1611 = vsel %vm1609, %v1578, %v1329
        %v1613 = vsel %vm1609, %v1580, %v1331
        %v1615 = vsel %vm1609, %v1582, %v1333
        %v1617 = vsel %vm1609, %v1584, %v1335
        %v1619 = vsel %vm1609, %v1586, %v1337
        %v1621 = vsel %vm1609, %v1588, %v1339
        %v1623 = vsel %vm1609, %v1590, %v1341
        %v1625 = vsel %vm1609, %v1592, %v1343
        %v1627 = vsel %vm1609, %v1594, %v1345
        %v1629 = vsel %vm1609, %v1596, %v1347
        %v1631 = vsel %vm1609, %v1598, %v1349
        %v1633 = vsel %vm1609, %v1600, %v1351
        %v1635 = vsel %vm1609, %v1602, %v1353
        %v1637 = vsel %vm1609, %v1604, %v1355
        %v1639 = vsel %vm1609, %v1606, %v1357
        %v1641 = vsel %vm1609, %v1608, %v1359
        %vm1642 = vcmask 523264
        %v1644 = vsel %vm1642, %v1611, %v1364
        %v1646 = vsel %vm1642, %v1613, %v1366
        %v1648 = vsel %vm1642, %v1615, %v1368
        %v1650 = vsel %vm1642, %v1617, %v1370
        %v1652 = vsel %vm1642, %v1619, %v1372
        %v1654 = vsel %vm1642, %v1621, %v1374
        %v1656 = vsel %vm1642, %v1623, %v1376
        %v1658 = vsel %vm1642, %v1625, %v1378
        %v1660 = vsel %vm1642, %v1627, %v1380
        %v1662 = vsel %vm1642, %v1629, %v1382
        %v1664 = vsel %vm1642, %v1631, %v1384
        %v1666 = vsel %vm1642, %v1633, %v1386
        %v1668 = vsel %vm1642, %v1635, %v1388
        %v1670 = vsel %vm1642, %v1637, %v1390
        %v1672 = vsel %vm1642, %v1639, %v1392
        %v1674 = vsel %vm1642, %v1641, %v1394
        %v1675 = vld [vmem:[%s286] sm:$0xf]
        %v1676 = vld [vmem:[%s286 + $0x4] sm:$0xf]
        %v1677 = vld [vmem:[%s286 + $0x8] sm:$0xf]
        %v1678 = vld [vmem:[%s286 + $0xc] sm:$0xf]
        %v1679 = vld [vmem:[%s286 + $0x10] sm:$0xf]
        %v1680 = vld [vmem:[%s286 + $0x14] sm:$0xf]
        %v1681 = vld [vmem:[%s286 + $0x18] sm:$0xf]
        %v1682 = vld [vmem:[%s286 + $0x1c] sm:$0xf]
        %v1683 = vld [vmem:[%s286 + $0x20] sm:$0xf]
        %v1684 = vld [vmem:[%s289] sm:$0x1]
        %v1686 = vperm.slane %v1684, 0
        %v1697 = vunpack.c.l.b16 %v1675
        %v1698 = vunpack.c.l.b16 %v1676
        %v1699 = vunpack.c.l.b16 %v1677
        %v1700 = vunpack.c.l.b16 %v1678
        %v1701 = vunpack.c.l.b16 %v1679
        %v1702 = vunpack.c.l.b16 %v1680
        %v1703 = vunpack.c.l.b16 %v1681
        %v1704 = vunpack.c.l.b16 %v1682
        %v1705 = vunpack.c.l.b16 %v1683
        %v1706 = vpack.c.b16 %v1698, %v1697
        %v1707 = vpack.c.b16 %v1700, %v1699
        %v1708 = vpack.c.b16 %v1702, %v1701
        %v1709 = vpack.c.b16 %v1704, %v1703
        %v1710 = vpack.c.b16 %v1705, %v1705
        %vm1715 = vcmask 588800
        %v1716 = vsel %vm1715, %v1644, 0
        %v1718 = vsel %vm1715, %v1646, 0
        %v1720 = vsel %vm1715, %v1648, 0
        %v1722 = vsel %vm1715, %v1650, 0
        %v1724 = vsel %vm1715, %v1652, 0
        %v1726 = vsel %vm1715, %v1654, 0
        %v1728 = vsel %vm1715, %v1656, 0
        %v1730 = vsel %vm1715, %v1658, 0
        %v1732 = vsel %vm1715, %v1660, 0
        %v1734 = vsel %vm1715, %v1662, 0
        %v1736 = vsel %vm1715, %v1664, 0
        %v1738 = vsel %vm1715, %v1666, 0
        %v1740 = vsel %vm1715, %v1668, 0
        %v1742 = vsel %vm1715, %v1670, 0
        %v1744 = vsel %vm1715, %v1672, 0
        %v1746 = vsel %vm1715, %v1674, 0
        %vm1748 = vcmask 1043456
        %v1750 = vsel %vm1748, %v1710, 0
        %1752 = vmatpush.bf16.msra.mxu0 0
        %1753 = vmatpush.bf16.msra.mxu0 0
        %1754 = vmatpush.bf16.msra.mxu0 0
        %1755 = vmatpush.bf16.msra.mxu0 %v1750
        %1756 = vmatpush.bf16.msra.mxu0 %v1709
        %1757 = vmatpush.bf16.msra.mxu0 %v1708
        %1758 = vmatpush.bf16.msra.mxu0 %v1707
        %1759 = vmatpush.bf16.msra.mxu0 %v1706
        %1760 = vmatmul.bf16.gmra.mxu0 %v1716
        %v1761 = vpop.f32.mrf.mxu0
        %v1762 = vadd.f32 %v1686, %v1761
        %v1763 = vpop.f32.mrf.mxu0
        %v1764 = vadd.f32 %v1686, %v1763
        %1765 = vmatmul.bf16.gmra.mxu0 %v1718
        %v1766 = vpop.f32.mrf.mxu0
        %v1767 = vadd.f32 %v1686, %v1766
        %v1768 = vpop.f32.mrf.mxu0
        %v1769 = vadd.f32 %v1686, %v1768
        %1770 = vmatmul.bf16.gmra.mxu0 %v1720
        %v1771 = vpop.f32.mrf.mxu0
        %v1772 = vadd.f32 %v1686, %v1771
        %v1773 = vpop.f32.mrf.mxu0
        %v1774 = vadd.f32 %v1686, %v1773
        %1775 = vmatmul.bf16.gmra.mxu0 %v1722
        %v1776 = vpop.f32.mrf.mxu0
        %v1777 = vadd.f32 %v1686, %v1776
        %v1778 = vpop.f32.mrf.mxu0
        %v1779 = vadd.f32 %v1686, %v1778
        %1780 = vmatmul.bf16.gmra.mxu0 %v1724
        %v1781 = vpop.f32.mrf.mxu0
        %v1782 = vadd.f32 %v1686, %v1781
        %v1783 = vpop.f32.mrf.mxu0
        %v1784 = vadd.f32 %v1686, %v1783
        %1785 = vmatmul.bf16.gmra.mxu0 %v1726
        %v1786 = vpop.f32.mrf.mxu0
        %v1787 = vadd.f32 %v1686, %v1786
        %v1788 = vpop.f32.mrf.mxu0
        %v1789 = vadd.f32 %v1686, %v1788
        %1790 = vmatmul.bf16.gmra.mxu0 %v1728
        %v1791 = vpop.f32.mrf.mxu0
        %v1792 = vadd.f32 %v1686, %v1791
        %v1793 = vpop.f32.mrf.mxu0
        %v1794 = vadd.f32 %v1686, %v1793
        %1795 = vmatmul.bf16.gmra.mxu0 %v1730
        %v1796 = vpop.f32.mrf.mxu0
        %v1797 = vadd.f32 %v1686, %v1796
        %v1798 = vpop.f32.mrf.mxu0
        %v1799 = vadd.f32 %v1686, %v1798
        %1800 = vmatmul.bf16.gmra.mxu0 %v1732
        %v1801 = vpop.f32.mrf.mxu0
        %v1802 = vadd.f32 %v1686, %v1801
        %v1803 = vpop.f32.mrf.mxu0
        %v1804 = vadd.f32 %v1686, %v1803
        %1805 = vmatmul.bf16.gmra.mxu0 %v1734
        %v1806 = vpop.f32.mrf.mxu0
        %v1807 = vadd.f32 %v1686, %v1806
        %v1808 = vpop.f32.mrf.mxu0
        %v1809 = vadd.f32 %v1686, %v1808
        %1810 = vmatmul.bf16.gmra.mxu0 %v1736
        %v1811 = vpop.f32.mrf.mxu0
        %v1812 = vadd.f32 %v1686, %v1811
        %v1813 = vpop.f32.mrf.mxu0
        %v1814 = vadd.f32 %v1686, %v1813
        %1815 = vmatmul.bf16.gmra.mxu0 %v1738
        %v1816 = vpop.f32.mrf.mxu0
        %v1817 = vadd.f32 %v1686, %v1816
        %v1818 = vpop.f32.mrf.mxu0
        %v1819 = vadd.f32 %v1686, %v1818
        %1820 = vmatmul.bf16.gmra.mxu0 %v1740
        %v1821 = vpop.f32.mrf.mxu0
        %v1822 = vadd.f32 %v1686, %v1821
        %v1823 = vpop.f32.mrf.mxu0
        %v1824 = vadd.f32 %v1686, %v1823
        %1825 = vmatmul.bf16.gmra.mxu0 %v1742
        %v1826 = vpop.f32.mrf.mxu0
        %v1827 = vadd.f32 %v1686, %v1826
        %v1828 = vpop.f32.mrf.mxu0
        %v1829 = vadd.f32 %v1686, %v1828
        %1830 = vmatmul.bf16.gmra.mxu0 %v1744
        %v1831 = vpop.f32.mrf.mxu0
        %v1832 = vadd.f32 %v1686, %v1831
        %v1833 = vpop.f32.mrf.mxu0
        %v1834 = vadd.f32 %v1686, %v1833
        %1835 = vmatmul.bf16.gmra.mxu0 %v1746
        %v1836 = vpop.f32.mrf.mxu0
        %v1837 = vadd.f32 %v1686, %v1836
        %v1838 = vpop.f32.mrf.mxu0
        %v1839 = vadd.f32 %v1686, %v1838
        %1840 = vdwg.mxu0
        %v1841 = vmax.f32 %v1762, 0.0
        %v1842 = vmax.f32 %v1764, 0.0
        %v1843 = vmax.f32 %v1767, 0.0
        %v1844 = vmax.f32 %v1769, 0.0
        %v1845 = vmax.f32 %v1772, 0.0
        %v1846 = vmax.f32 %v1774, 0.0
        %v1847 = vmax.f32 %v1777, 0.0
        %v1848 = vmax.f32 %v1779, 0.0
        %v1849 = vmax.f32 %v1782, 0.0
        %v1850 = vmax.f32 %v1784, 0.0
        %v1851 = vmax.f32 %v1787, 0.0
        %v1852 = vmax.f32 %v1789, 0.0
        %v1853 = vmax.f32 %v1792, 0.0
        %v1854 = vmax.f32 %v1794, 0.0
        %v1855 = vmax.f32 %v1797, 0.0
        %v1856 = vmax.f32 %v1799, 0.0
        %v1857 = vmax.f32 %v1802, 0.0
        %v1858 = vmax.f32 %v1804, 0.0
        %v1859 = vmax.f32 %v1807, 0.0
        %v1860 = vmax.f32 %v1809, 0.0
        %v1861 = vmax.f32 %v1812, 0.0
        %v1862 = vmax.f32 %v1814, 0.0
        %v1863 = vmax.f32 %v1817, 0.0
        %v1864 = vmax.f32 %v1819, 0.0
        %v1865 = vmax.f32 %v1822, 0.0
        %v1866 = vmax.f32 %v1824, 0.0
        %v1867 = vmax.f32 %v1827, 0.0
        %v1868 = vmax.f32 %v1829, 0.0
        %v1869 = vmax.f32 %v1832, 0.0
        %v1870 = vmax.f32 %v1834, 0.0
        %v1871 = vmax.f32 %v1837, 0.0
        %v1872 = vmax.f32 %v1839, 0.0
        %v1873 = vpack.c.bf16 %v1842, %v1841
        %v1874 = vpack.c.bf16 %v1844, %v1843
        %v1875 = vpack.c.bf16 %v1846, %v1845
        %v1876 = vpack.c.bf16 %v1848, %v1847
        %v1877 = vpack.c.bf16 %v1850, %v1849
        %v1878 = vpack.c.bf16 %v1852, %v1851
        %v1879 = vpack.c.bf16 %v1854, %v1853
        %v1880 = vpack.c.bf16 %v1856, %v1855
        %v1881 = vpack.c.bf16 %v1858, %v1857
        %v1882 = vpack.c.bf16 %v1860, %v1859
        %v1883 = vpack.c.bf16 %v1862, %v1861
        %v1884 = vpack.c.bf16 %v1864, %v1863
        %v1885 = vpack.c.bf16 %v1866, %v1865
        %v1886 = vpack.c.bf16 %v1868, %v1867
        %v1887 = vpack.c.bf16 %v1870, %v1869
        %v1888 = vpack.c.bf16 %v1872, %v1871
        %v1889 = vld [vmem:[#allocation2] sm:$0xff]
        %v1890 = vld [vmem:[%s294] sm:$0xff]
        %v1892 = vunpack.c.l.b16 %v1890
        %v1893 = vunpack.c.h.b16 %v1890
        %v1894 = vpack.c.b16 %v1892, %v1892
        %v1895 = vpack.c.b16 %v1893, %v1893
        %1898 = vmatpush.bf16.msra.mxu0 %v1880
        %1899 = vmatpush.bf16.msra.mxu0 %v1879
        %1900 = vmatpush.bf16.msra.mxu0 %v1878
        %1901 = vmatpush.bf16.msra.mxu0 %v1877
        %1902 = vmatpush.bf16.msra.mxu0 %v1876
        %1903 = vmatpush.bf16.msra.mxu0 %v1875
        %1904 = vmatpush.bf16.msra.mxu0 %v1874
        %1905 = vmatpush.bf16.msra.mxu0 %v1873
        %1906 = vmatmul.bf16.gmra.mxu0 %v1894
        %v1907 = vpop.f32.mrf.mxu0
        %v1908 = vadd.f32 0.0, %v1907
        %v1909 = vpop.f32.mrf.mxu0
        %1910 = vdwg.mxu0
        %1911 = vmatpush.bf16.msra.mxu0 %v1888
        %1912 = vmatpush.bf16.msra.mxu0 %v1887
        %1913 = vmatpush.bf16.msra.mxu0 %v1886
        %1914 = vmatpush.bf16.msra.mxu0 %v1885
        %1915 = vmatpush.bf16.msra.mxu0 %v1884
        %1916 = vmatpush.bf16.msra.mxu0 %v1883
        %1917 = vmatpush.bf16.msra.mxu0 %v1882
        %1918 = vmatpush.bf16.msra.mxu0 %v1881
        %1919 = vmatmul.bf16.gmra.mxu0 %v1895
        %v1920 = vpop.f32.mrf.mxu0
        %v1921 = vadd.f32 %v1908, %v1920
        %v1922 = vpop.f32.mrf.mxu0
        %1923 = vdwg.mxu0
        %v1924 = vadd.f32 %v1889, %v1921
        %1925 = vst [vmem:[#allocation2] sm:$0xff] %v1924
        // Predicated region
        $region45: #{tpu_custom_call.1} parent=39 // pred_check
          %p1926 = pneg %p296
        $region46: #{tpu_custom_call.1} parent=39 // pred_check_branch
          %1928 = sbr.rel (%p1926) target = $region48
        $region47: #{tpu_custom_call.1} parent=39 // pred_region
          %v1929 = vld [vmem:[#allocation2] sm:$0xff]
          %v1930 = vld [vmem:[%s4] sm:$0xff]
          %1932 = vset.pattern.permute.xlu0 0
          %1933 = vperm.xlu0 %1932, %v1930
          %v1934 = vpop.permute.xlu0 %1933
          %v1936 = vmul.f32 %v1929, %v1934
          %1937 = vst [vmem:[%s277] sm:$0xff] %v1936
        $region48: #{tpu_custom_call.1} parent=39 // pred_fallthru
          _
        %s1938 = sand.u32 %s173, 1
        %s1939 = scalar_lea.sflag [#allocation4], %s1938
        %s1940 = sand.u32 %s173, 1
        %s1941 = smul.addr %s1940, 8
        %s1942 = scalar_lea.vmem [#allocation3], %s1941
        // Predicated region
        $region49: #{tpu_custom_call.1} parent=39 // pred_check
          %p1943 = pneg %p183
        $region50: #{tpu_custom_call.1} parent=39 // pred_check_branch
          %1945 = sbr.rel (%p1943) target = $region52
        $region51: #{tpu_custom_call.1} parent=39 // pred_region
          %1947 = vsyncadd %s1939, 0
          %s1948 = sadd.s32 %s25, %s24
          %s1949 = smul.addr %s1948, 8
          %s1950 = scalar_lea.hbm %s5, %s1949
          %s1952 = sshll.u32 %s1942, 4
          %s1953 = int_to_ptr.vmem [resolvable:$true] %s1952
          %s1954 = sshll.u32 %s1950, 4
          %s1955 = int_to_ptr.hbm [resolvable:$true] %s1954
          %1957 = dma.vmem_to_hbm [thread:$0]  %s1953, 128, %s1955, %s1939
        $region52: #{tpu_custom_call.1} parent=39 // pred_fallthru
          _
      $region40: #{tpu_custom_call.1} parent=5 // pred_fallthru
        _
      %p1958 = scmp.le.s32.totalorder 2, %s14
      // Predicated region
      $region53: #{tpu_custom_call.1} parent=5 // pred_check
        %p1959 = pneg %p1958
      $region54: #{tpu_custom_call.1} parent=5 // pred_check_branch
        %1961 = sbr.rel (%p1959) target = $region56
      $region55: #{tpu_custom_call.1} parent=5 // pred_region
        %s1962 = ssub.s32 %s14, 2
        // Predicated region
        $region57: #{tpu_custom_call.1} parent=55 // pred_check
          %p1963 = pneg %p189
        $region58: #{tpu_custom_call.1} parent=55 // pred_check_branch
          %1965 = sbr.rel (%p1963) target = $region60
        $region59: #{tpu_custom_call.1} parent=55 // pred_region
          %s1966 = sand.u32 %s174, 1
          %s1967 = scalar_lea.sflag [#allocation4], %s1966
          %s1968 = sand.u32 %s174, 1
          %s1969 = smul.addr %s1968, 8
          %s1970 = scalar_lea.vmem [#allocation3], %s1969
          %1972 = dma.done %s1967, 128
        $region60: #{tpu_custom_call.1} parent=55 // pred_fallthru
          _
      $region56: #{tpu_custom_call.1} parent=5 // pred_fallthru
        _
    $region6: #{tpu_custom_call.1} parent=1 // loop_footer
      %s18 = sadd.s32 1, %s14
    $region7: #{tpu_custom_call.1} parent=1 // loop_footer_branch
      %13 = sbr.rel target = $region3
    $region8: #{tpu_custom_call.1} parent=1 // loop_exit
      _
    %1973 = vsyncpa [#allocation4], 1
    %s1974 = scalar_lea.sflag [#allocation4], 1
    %1975 = vsyncpa %s1974, 1

</llo_original>
